<compile_context>
chip_gen: v6e
topology: v6e:2x2x1
jax: 0.10.0
libtpu: 0.0.40
codegen_flags: <defaults>
</compile_context>

<pallas_src>
import jax
import jax.numpy as jnp
from jax.experimental import pallas as pl
from jax.experimental.pallas import tpu as pltpu

EPS = 1e-5


def bn_add_conv_kernel(x_ref, skip_ref, params_ref, w_ref, o_ref, y_ref):
    # x_ref, skip_ref : (Cin, M)
    # params_ref      : (Cin, 2)   col 0 = gamma, col 1 = beta
    # w_ref           : (cout_blk, Cin)
    # o_ref           : (cout_blk, M)
    # y_ref (scratch) : (Cin, M) f32, persistent across grid steps

    @pl.when(pl.program_id(1) == 0)
    def _compute_bn_y():
        x = x_ref[...].astype(jnp.float32)
        # Training-mode BN stats over M (lane axis). Two-pass variance: robust against
        # catastrophic cancellation for non-zero-mean feature maps.
        mean = jnp.mean(x, axis=-1, keepdims=True)            # (Cin, 1)
        diff = x - mean
        var = jnp.mean(diff * diff, axis=-1, keepdims=True)   # (Cin, 1), biased variance
        gamma = params_ref[:, 0:1]                            # (Cin, 1)
        beta = params_ref[:, 1:2]                             # (Cin, 1)
        scale = jax.lax.rsqrt(var + EPS) * gamma              # fold inv_std * gamma
        # Affine BN + residual add in one fused elementwise pass; cached for all Cout blocks.
        y_ref[...] = diff * scale + beta + skip_ref[...].astype(jnp.float32)

    # 1x1 conv == (cout_blk, Cin) @ (Cin, M) on the MXU, f32 accumulation.
    o_ref[...] = jnp.dot(
        w_ref[...], y_ref[...], preferred_element_type=jnp.float32
    ).astype(o_ref.dtype)


def _num_tensorcores() -> int:
    """TensorCores addressable by megacore 'parallel' sharding on the current device."""
    try:
        info = pltpu.get_tpu_info()
        for attr in ("num_cores", "tensorcores_per_chip", "num_tensorcores", "cores_per_chip"):
            n = getattr(info, attr, None)
            if isinstance(n, int) and 1 <= n <= 8:
                return n
    except Exception:
        pass
    try:
        kind = jax.devices()[0].device_kind.lower()
        if ("7x" in kind) or ("v7" in kind) or ("v4" in kind) or ("v5p" in kind):
            return 2  # 2 TensorCores per device (v7x, v4/v5p megacore)
    except Exception:
        pass
    return 1  # v5e / v6e: single TensorCore


def _pick_cout_block(cout_per_core: int) -> int:
    # ~240-row blocks: big enough to keep the MXU busy, deep enough grid for weight-prefetch /
    # output-writeback overlap, without paying too many ~0.35us grid-step overheads.
    for blk in (240, 256, 192, 160, 128, 120, 96, 80, 64, 48, 40, 32, 24, 16, 8):
        if cout_per_core % blk == 0:
            return blk
    return cout_per_core


def bn_add_conv1x1(x409, x396, gamma, beta, conv_w):
    """x409, x396: NCHW (N, Cin, H, W); conv_w: (Cout, Cin, 1, 1). Returns NCHW (N, Cout, H, W)."""
    N, Cin, H, W = x409.shape
    Cout = conv_w.shape[0]
    M = N * H * W

    # NCHW -> channels-major (Cin, M). Pure reshape (zero-cost) when N == 1.
    if N == 1:
        x_cm = x409.reshape(Cin, M)
        s_cm = x396.reshape(Cin, M)
    else:
        # TODO(synk): for N > 1 this HBM transpose is a separate XLA op; a batched-stats grid
        # over N would avoid it (not needed for the module's N == 1 case).
        x_cm = jnp.transpose(x409, (1, 0, 2, 3)).reshape(Cin, M)
        s_cm = jnp.transpose(x396, (1, 0, 2, 3)).reshape(Cin, M)

    w_mat = conv_w.reshape(Cout, Cin).astype(jnp.float32)
    # Pack gamma|beta into a single (Cin, 2) block -> one tiny DMA instead of two.
    params = jnp.stack([gamma.astype(jnp.float32), beta.astype(jnp.float32)], axis=-1)

    n_core = _num_tensorcores()
    if Cout % n_core != 0:
        n_core = 1
    cout_blk = _pick_cout_block(Cout // n_core)
    n_cout = Cout // (n_core * cout_blk)

    cost = pl.CostEstimate(
        flops=2 * M * Cin * Cout + 7 * M * Cin,
        transcendentals=Cin,
        bytes_accessed=4 * (2 * M * Cin + Cin * Cout + M * Cout + 2 * Cin),
    )

    out_cm = pl.pallas_call(
        bn_add_conv_kernel,
        out_shape=jax.ShapeDtypeStruct((Cout, M), x409.dtype),
        grid=(n_core, n_cout),
        in_specs=[
            pl.BlockSpec((Cin, M), lambda c, j: (0, 0)),   # x    (index never changes -> resident)
            pl.BlockSpec((Cin, M), lambda c, j: (0, 0)),   # skip (resident)
            pl.BlockSpec((Cin, 2), lambda c, j: (0, 0)),   # gamma|beta
            pl.BlockSpec((cout_blk, Cin), lambda c, j: (c * n_cout + j, 0)),  # weight block
        ],
        out_specs=pl.BlockSpec((cout_blk, M), lambda c, j: (c * n_cout + j, 0)),
        scratch_shapes=[pltpu.VMEM((Cin, M), jnp.float32)],  # cached y, persists across steps
        compiler_params=pltpu.CompilerParams(
            dimension_semantics=("parallel", "arbitrary")
        ),
        cost_estimate=cost,
    )(x_cm, s_cm, params, w_mat)

    # (Cout, M) -> NCHW. Pure reshape when N == 1.
    if N == 1:
        return out_cm.reshape(1, Cout, H, W)
    return jnp.transpose(out_cm.reshape(Cout, N, H, W), (1, 0, 2, 3))


def reference(x409, x396, gamma, beta, conv_w):
    x = x409.astype(jnp.float32)
    mean = jnp.mean(x, axis=(0, 2, 3), keepdims=True)
    var = jnp.mean((x - mean) ** 2, axis=(0, 2, 3), keepdims=True)
    y = (x - mean) / jnp.sqrt(var + EPS)
    y = y * gamma.reshape(1, -1, 1, 1) + beta.reshape(1, -1, 1, 1)
    y = y + x396.astype(jnp.float32)
    w = conv_w.reshape(conv_w.shape[0], conv_w.shape[1])   # (Cout, Cin)
    return jnp.einsum("nchw,oc->nohw", y, w)


if __name__ == "__main__":
    N, Cin, H, W = 1, 160, 14, 14
    Cout = 960

    key = jax.random.PRNGKey(0)
    k1, k2, k3, k4, k5 = jax.random.split(key, 5)

    x409 = jax.random.normal(k1, (N, Cin, H, W), dtype=jnp.float32)
    x396 = jax.random.normal(k2, (N, Cin, H, W), dtype=jnp.float32)

    # BatchNorm2d affine parameters (perturbed from default init to exercise the affine path).
    gamma = 1.0 + 0.1 * jax.random.normal(k4, (Cin,), dtype=jnp.float32)
    beta = 0.1 * jax.random.normal(k5, (Cin,), dtype=jnp.float32)
    conv_w = jax.random.normal(k3, (Cout, Cin, 1, 1), dtype=jnp.float32) * 0.05

    out = bn_add_conv1x1(x409, x396, gamma, beta, conv_w)
    out = jax.block_until_ready(out)

    ref = reference(x409, x396, gamma, beta, conv_w)
    assert out.shape == (N, Cout, H, W), out.shape
    assert jnp.allclose(out, ref, atol=1e-3, rtol=1e-3), float(
        jnp.max(jnp.abs(out - ref))
    )

    print("KERNEL_OK")
</pallas_src>

<mosaic_0001>
module attributes {stable_mosaic.version = 11 : i64} {
  func.func @bn_add_conv_kernel(%arg0: i32, %arg1: i32, %arg2: memref<160x196xf32, #tpu.memory_space<vmem>>, %arg3: memref<160x196xf32, #tpu.memory_space<vmem>>, %arg4: memref<160x2xf32, #tpu.memory_space<vmem>>, %arg5: memref<240x160xf32, #tpu.memory_space<vmem>>, %arg6: memref<240x196xf32, #tpu.memory_space<vmem>>, %arg7: memref<160x196xf32, #tpu.memory_space<vmem>>) attributes {dimension_semantics = [#tpu.dimension_semantics<parallel>, #tpu.dimension_semantics<arbitrary>], iteration_bounds = array<i64: 1, 4>, scalar_prefetch = 0 : i64, scratch_operands = 1 : i64, tpu.core_type = #tpu.core_type<tc>, window_params = [{pipeline_mode = #tpu.pipeline_mode<synchronous>, transform_indices = @transform_0, window_bounds = array<i64: 160, 196>}, {pipeline_mode = #tpu.pipeline_mode<synchronous>, transform_indices = @transform_1, window_bounds = array<i64: 160, 196>}, {pipeline_mode = #tpu.pipeline_mode<synchronous>, transform_indices = @transform_2, window_bounds = array<i64: 160, 2>}, {transform_indices = @transform_3, window_bounds = array<i64: 240, 160>}, {transform_indices = @transform_4, window_bounds = array<i64: 240, 196>}]} {
    %c0_i32 = arith.constant 0 : i32
    %0 = arith.cmpi eq, %arg1, %c0_i32 : i32
    %1 = arith.extui %0 : i1 to i32
    %c0_i32_0 = arith.constant 0 : i32
    %2 = arith.cmpi ne, %1, %c0_i32_0 : i32
    scf.if %2 {
      %c0_6 = arith.constant 0 : index
      %c0_7 = arith.constant 0 : index
      %7 = vector.load %arg2[%c0_6, %c0_7] : memref<160x196xf32, #tpu.memory_space<vmem>>, vector<160x196xf32>
      %cst_8 = arith.constant dense<0.000000e+00> : vector<160xf32>
      %8 = vector.multi_reduction <add>, %7, %cst_8 [1] : vector<160x196xf32> to vector<160xf32>
      %9 = vector.shape_cast %8 : vector<160xf32> to vector<160x1xf32>
      %cst_9 = arith.constant 1.960000e+02 : f32
      %10 = vector.broadcast %cst_9 : f32 to vector<160x1xf32>
      %11 = arith.divf %9, %10 : vector<160x1xf32>
      %12 = vector.broadcast %11 : vector<160x1xf32> to vector<160x196xf32>
      %13 = arith.subf %7, %12 : vector<160x196xf32>
      %14 = arith.mulf %13, %13 : vector<160x196xf32>
      %cst_10 = arith.constant dense<0.000000e+00> : vector<160xf32>
      %15 = vector.multi_reduction <add>, %14, %cst_10 [1] : vector<160x196xf32> to vector<160xf32>
      %16 = vector.shape_cast %15 : vector<160xf32> to vector<160x1xf32>
      %cst_11 = arith.constant 1.960000e+02 : f32
      %17 = vector.broadcast %cst_11 : f32 to vector<160x1xf32>
      %18 = arith.divf %16, %17 : vector<160x1xf32>
      %c0_12 = arith.constant 0 : index
      %c0_13 = arith.constant 0 : index
      %19 = vector.load %arg4[%c0_12, %c0_13] : memref<160x2xf32, #tpu.memory_space<vmem>>, vector<160x1xf32>
      %c0_14 = arith.constant 0 : index
      %c1 = arith.constant 1 : index
      %20 = vector.load %arg4[%c0_14, %c1] : memref<160x2xf32, #tpu.memory_space<vmem>>, vector<160x1xf32>
      %cst_15 = arith.constant 9.99999974E-6 : f32
      %21 = vector.broadcast %cst_15 : f32 to vector<160x1xf32>
      %22 = arith.addf %18, %21 : vector<160x1xf32>
      %23 = math.rsqrt %22 : vector<160x1xf32>
      %24 = arith.mulf %23, %19 : vector<160x1xf32>
      %25 = vector.broadcast %24 : vector<160x1xf32> to vector<160x196xf32>
      %26 = arith.mulf %13, %25 : vector<160x196xf32>
      %27 = vector.broadcast %20 : vector<160x1xf32> to vector<160x196xf32>
      %28 = arith.addf %26, %27 : vector<160x196xf32>
      %c0_16 = arith.constant 0 : index
      %c0_17 = arith.constant 0 : index
      %29 = vector.load %arg3[%c0_16, %c0_17] : memref<160x196xf32, #tpu.memory_space<vmem>>, vector<160x196xf32>
      %30 = arith.addf %28, %29 : vector<160x196xf32>
      %c0_18 = arith.constant 0 : index
      %c0_19 = arith.constant 0 : index
      %31 = vector.load %arg7[%c0_18, %c0_19] : memref<160x196xf32, #tpu.memory_space<vmem>>, vector<160x196xf32>
      tpu.vector_store %arg7[%c0_18, %c0_19], %30 {strides = array<i32>} : memref<160x196xf32, #tpu.memory_space<vmem>>, vector<160x196xf32>,
    } else {
    }
    %c0 = arith.constant 0 : index
    %c0_1 = arith.constant 0 : index
    %3 = vector.load %arg5[%c0, %c0_1] : memref<240x160xf32, #tpu.memory_space<vmem>>, vector<240x160xf32>
    %c0_2 = arith.constant 0 : index
    %c0_3 = arith.constant 0 : index
    %4 = vector.load %arg7[%c0_2, %c0_3] : memref<160x196xf32, #tpu.memory_space<vmem>>, vector<160x196xf32>
    %cst = arith.constant dense<0.000000e+00> : vector<240x196xf32>
    %5 = tpu.matmul %3, %4, %cst {dimension_numbers = #tpu.dot_dimension_numbers<[1], [0], [0], [1], [0, 0, 1, 1], [], []>} : vector<240x160xf32>, vector<160x196xf32>, vector<240x196xf32> -> vector<240x196xf32>
    %c0_4 = arith.constant 0 : index
    %c0_5 = arith.constant 0 : index
    %6 = vector.load %arg6[%c0_4, %c0_5] : memref<240x196xf32, #tpu.memory_space<vmem>>, vector<240x196xf32>
    tpu.vector_store %arg6[%c0_4, %c0_5], %5 {strides = array<i32>} : memref<240x196xf32, #tpu.memory_space<vmem>>, vector<240x196xf32>,
    return
  }
  func.func @transform_0(%arg0: i32, %arg1: i32) -> (i32, i32) {
    %c0_i32 = arith.constant 0 : i32
    %c0_i32_0 = arith.constant 0 : i32
    %c0_i32_1 = arith.constant 0 : i32
    return %c0_i32, %c0_i32_0 : i32, i32
  }
  func.func @transform_1(%arg0: i32, %arg1: i32) -> (i32, i32) {
    %c0_i32 = arith.constant 0 : i32
    %c0_i32_0 = arith.constant 0 : i32
    %c0_i32_1 = arith.constant 0 : i32
    return %c0_i32, %c0_i32_0 : i32, i32
  }
  func.func @transform_2(%arg0: i32, %arg1: i32) -> (i32, i32) {
    %c0_i32 = arith.constant 0 : i32
    %c0_i32_0 = arith.constant 0 : i32
    %c0_i32_1 = arith.constant 0 : i32
    return %c0_i32, %c0_i32_0 : i32, i32
  }
  func.func @transform_3(%arg0: i32, %arg1: i32) -> (i32, i32) {
    %c4_i32 = arith.constant 4 : i32
    %0 = arith.muli %arg0, %c4_i32 : i32
    %1 = arith.addi %0, %arg1 : i32
    %c0_i32 = arith.constant 0 : i32
    %c0_i32_0 = arith.constant 0 : i32
    return %1, %c0_i32 : i32, i32
  }
  func.func @transform_4(%arg0: i32, %arg1: i32) -> (i32, i32) {
    %c4_i32 = arith.constant 4 : i32
    %0 = arith.muli %arg0, %c4_i32 : i32
    %1 = arith.addi %0, %arg1 : i32
    %c0_i32 = arith.constant 0 : i32
    %c0_i32_0 = arith.constant 0 : i32
    return %1, %c0_i32 : i32, i32
  }
}

</mosaic_0001>

<llo_original>
// kernel: tpu_custom_call.1
$region0: #{tpu_custom_call.1}
  #allocation0 [shape = 'u32[]', space=smem, size = 0x4, offset = 0x4, fixed_abs, tag = 'smem constant byte address 0x4 - core index']
  #allocation1 [shape = 'u32[144,128]{1,0:T(1,128)}', space=vmem, size = 0x12000, scoped, tag = 'internal scratch']
  #allocation2 [shape = 'f32[160,196]{1,0:T(8,128)}', space=vmem, size = 0x28000, scoped, tag = 'scratch operand']
  %s0 = inlined_call_operand.vmem [shape: f32[160,196], index: 0, kind: input, shape index: {}]
  %s1 = inlined_call_operand.vmem [shape: f32[160,196], index: 1, kind: input, shape index: {}]
  %s2 = inlined_call_operand.vmem [shape: f32[160,2], index: 2, kind: input, shape index: {}]
  %s3 = inlined_call_operand.vmem [shape: f32[960,160], index: 3, kind: input, shape index: {}]
  %s4 = inlined_call_operand.vmem [shape: f32[960,196], index: 4, kind: output, shape index: {}]
  %s5 = sld [smem:[#allocation0]]
  $region53: #{tpu_custom_call.1} parent=0
    _
  %s7 = ssub.s32 1, %s5
  %s8 = scalar_select 0, %s7, %s5
  loop: start=0, step=1, limit=6
  $region2: #{tpu_custom_call.1} parent=0 // loop_pre_header
    _
  $region3: #{tpu_custom_call.1} parent=0 // loop_header
    %s10 = sphi 0, %s14
    %p11 = scmp.ge.s32.totalorder %s10, 6
    %s17 = sphi 0, %s29
    %s18 = sphi 0, %s25
    %s19 = sphi 0, %s17
    %s20 = sphi 0, %s18
    %s21 = sphi 0, %s19
    %s22 = sphi 0, %s20
    %s30 = sphi 0, %s30
    %s32 = sphi 0, %s30
    %s33 = sphi 0, %s32
    %s47 = sphi 0, %s33
    %s51 = sphi 0, %s51
    %s53 = sphi 0, %s51
    %s54 = sphi 0, %s53
    %s68 = sphi 0, %s54
    %s72 = sphi 0, %s72
    %s74 = sphi 0, %s72
    %s75 = sphi 0, %s74
    %s89 = sphi 0, %s75
    %s99 = sphi 0, %s101
    %s102 = sphi 0, %s99
    %s103 = sphi 0, %s102
    %s119 = sphi 0, %s103
    %s129 = sphi 0, %s131
    %s132 = sphi 0, %s129
    %s133 = sphi 0, %s132
    %s149 = sphi 0, %s133
  $region4: #{tpu_custom_call.1} parent=0 // loop_header_branch
    %13 = sbr.rel (%p11) target = $region8
  $region5: #{tpu_custom_call.1} parent=0 // loop_body
    %s15 = ssub.s32 %s10, 1
    %s16 = ssub.s32 %s10, 2
    %s23 = sadd.s32 1, %s18
    %p24 = scmp.ge.s32.totalorder %s23, 4
    %s25 = scalar_select %p24, 0, %s23
    %s26 = sadd.s32 1, %s17
    %s27 = scalar_select %p24, %s26, %s17
    %p28 = scmp.ge.s32.totalorder %s27, 1
    %s29 = scalar_select %p28, 0, %s27
    %s31 = sadd.s32 %s30, 1
    %p34 = scmp.eq.s32.totalorder %s10, 3
    %p35 = scmp.ne.s32.totalorder %s30, %s32
    %p36 = scmp.eq.s32.totalorder %s10, 0
    %p37 = por %p35, %p36
    %p38 = scmp.ne.s32.totalorder %s30, %s32
    %p39 = scmp.eq.s32.totalorder %s15, 3
    %p40 = por %p38, %p39
    %p41 = scmp.ne.s32.totalorder %s32, %s33
    %p42 = scmp.eq.s32.totalorder %s15, 0
    %p43 = por %p41, %p42
    %p44 = scmp.ne.s32.totalorder %s32, %s33
    %p45 = scmp.eq.s32.totalorder %s16, 3
    %p46 = por %p44, %p45
    %p48 = scmp.ne.s32.totalorder %s33, %s47
    %p49 = scmp.eq.s32.totalorder %s16, 0
    %p50 = por %p48, %p49
    %s52 = sadd.s32 %s51, 1
    %p55 = scmp.eq.s32.totalorder %s10, 3
    %p56 = scmp.ne.s32.totalorder %s51, %s53
    %p57 = scmp.eq.s32.totalorder %s10, 0
    %p58 = por %p56, %p57
    %p59 = scmp.ne.s32.totalorder %s51, %s53
    %p60 = scmp.eq.s32.totalorder %s15, 3
    %p61 = por %p59, %p60
    %p62 = scmp.ne.s32.totalorder %s53, %s54
    %p63 = scmp.eq.s32.totalorder %s15, 0
    %p64 = por %p62, %p63
    %p65 = scmp.ne.s32.totalorder %s53, %s54
    %p66 = scmp.eq.s32.totalorder %s16, 3
    %p67 = por %p65, %p66
    %p69 = scmp.ne.s32.totalorder %s54, %s68
    %p70 = scmp.eq.s32.totalorder %s16, 0
    %p71 = por %p69, %p70
    %s73 = sadd.s32 %s72, 1
    %p76 = scmp.eq.s32.totalorder %s10, 3
    %p77 = scmp.ne.s32.totalorder %s72, %s74
    %p78 = scmp.eq.s32.totalorder %s10, 0
    %p79 = por %p77, %p78
    %p80 = scmp.ne.s32.totalorder %s72, %s74
    %p81 = scmp.eq.s32.totalorder %s15, 3
    %p82 = por %p80, %p81
    %p83 = scmp.ne.s32.totalorder %s74, %s75
    %p84 = scmp.eq.s32.totalorder %s15, 0
    %p85 = por %p83, %p84
    %p86 = scmp.ne.s32.totalorder %s74, %s75
    %p87 = scmp.eq.s32.totalorder %s16, 3
    %p88 = por %p86, %p87
    %p90 = scmp.ne.s32.totalorder %s75, %s89
    %p91 = scmp.eq.s32.totalorder %s16, 0
    %p92 = por %p90, %p91
    %s93 = smul.u32 %s17, 4
    %s94 = sadd.s32 %s93, %s18
    %s95 = smul.u32 %s29, 4
    %s96 = sadd.s32 %s95, %s25
    %s97 = ssub.s32 %s94, %s96
    %p98 = scmp.eq.s32.totalorder %s97, 0
    %s100 = sadd.s32 %s99, 1
    %s101 = scalar_select %p98, %s99, %s100
    %p104 = pneg %p98
    %p105 = scmp.eq.s32.totalorder %s10, 3
    %p106 = por %p104, %p105
    %p107 = scmp.ne.s32.totalorder %s99, %s102
    %p108 = scmp.eq.s32.totalorder %s10, 0
    %p109 = por %p107, %p108
    %p110 = scmp.ne.s32.totalorder %s99, %s102
    %p111 = scmp.eq.s32.totalorder %s15, 3
    %p112 = por %p110, %p111
    %p113 = scmp.ne.s32.totalorder %s102, %s103
    %p114 = scmp.eq.s32.totalorder %s15, 0
    %p115 = por %p113, %p114
    %p116 = scmp.ne.s32.totalorder %s102, %s103
    %p117 = scmp.eq.s32.totalorder %s16, 3
    %p118 = por %p116, %p117
    %p120 = scmp.ne.s32.totalorder %s103, %s119
    %p121 = scmp.eq.s32.totalorder %s16, 0
    %p122 = por %p120, %p121
    %s123 = smul.u32 %s17, 4
    %s124 = sadd.s32 %s123, %s18
    %s125 = smul.u32 %s29, 4
    %s126 = sadd.s32 %s125, %s25
    %s127 = ssub.s32 %s124, %s126
    %p128 = scmp.eq.s32.totalorder %s127, 0
    %s130 = sadd.s32 %s129, 1
    %s131 = scalar_select %p128, %s129, %s130
    %p134 = pneg %p128
    %p135 = scmp.eq.s32.totalorder %s10, 3
    %p136 = por %p134, %p135
    %p137 = scmp.ne.s32.totalorder %s129, %s132
    %p138 = scmp.eq.s32.totalorder %s10, 0
    %p139 = por %p137, %p138
    %p140 = scmp.ne.s32.totalorder %s129, %s132
    %p141 = scmp.eq.s32.totalorder %s15, 3
    %p142 = por %p140, %p141
    %p143 = scmp.ne.s32.totalorder %s132, %s133
    %p144 = scmp.eq.s32.totalorder %s15, 0
    %p145 = por %p143, %p144
    %p146 = scmp.ne.s32.totalorder %s132, %s133
    %p147 = scmp.eq.s32.totalorder %s16, 3
    %p148 = por %p146, %p147
    %p150 = scmp.ne.s32.totalorder %s133, %s149
    %p151 = scmp.eq.s32.totalorder %s16, 0
    %p152 = por %p150, %p151
    %p153 = scmp.le.s32.totalorder 1, %s10
    %p154 = scmp.lt.s32.totalorder %s10, 5
    %p155 = pnand %p153, %p154
    %p156 = pneg %p155
    // Predicated region
    $region9: #{tpu_custom_call.1} parent=5 // pred_check
      _
    $region10: #{tpu_custom_call.1} parent=5 // pred_check_branch
      %158 = sbr.rel (%p155) target = $region12
    $region11: #{tpu_custom_call.1} parent=5 // pred_region
      %s159 = ssub.s32 %s10, 1
      // Predicated region
      $region13: #{tpu_custom_call.1} parent=11 // pred_check
        %p160 = pneg %p43
      $region14: #{tpu_custom_call.1} parent=11 // pred_check_branch
        %162 = sbr.rel (%p160) target = $region16
      $region15: #{tpu_custom_call.1} parent=11 // pred_region
        _
      $region16: #{tpu_custom_call.1} parent=11 // pred_fallthru
        _
      // Predicated region
      $region17: #{tpu_custom_call.1} parent=11 // pred_check
        %p163 = pneg %p64
      $region18: #{tpu_custom_call.1} parent=11 // pred_check_branch
        %165 = sbr.rel (%p163) target = $region20
      $region19: #{tpu_custom_call.1} parent=11 // pred_region
        _
      $region20: #{tpu_custom_call.1} parent=11 // pred_fallthru
        _
      // Predicated region
      $region21: #{tpu_custom_call.1} parent=11 // pred_check
        %p166 = pneg %p85
      $region22: #{tpu_custom_call.1} parent=11 // pred_check_branch
        %168 = sbr.rel (%p166) target = $region24
      $region23: #{tpu_custom_call.1} parent=11 // pred_region
        _
      $region24: #{tpu_custom_call.1} parent=11 // pred_fallthru
        _
    $region12: #{tpu_custom_call.1} parent=5 // pred_fallthru
      _
    %p169 = scmp.lt.s32.totalorder %s10, 4
    // Predicated region
    $region25: #{tpu_custom_call.1} parent=5 // pred_check
      %p170 = pneg %p169
    $region26: #{tpu_custom_call.1} parent=5 // pred_check_branch
      %172 = sbr.rel (%p170) target = $region28
    $region27: #{tpu_custom_call.1} parent=5 // pred_region
      // Predicated region
      $region29: #{tpu_custom_call.1} parent=27 // pred_check
        %p173 = pneg %p109
      $region30: #{tpu_custom_call.1} parent=27 // pred_check_branch
        %175 = sbr.rel (%p173) target = $region32
      $region31: #{tpu_custom_call.1} parent=27 // pred_region
        %s176 = smul.u32 %s17, 4
        %s177 = sadd.s32 %s176, %s18
        %s178 = smul.u32 30, %s177
        %p179 = scmp.lt.s32.totalorder %s178, 119
        %s180 = scalar_select %p179, %s178, 119
        %s181 = smul.addr %s180, 2
        %s182 = smul.addr %s181, 8
        %s183 = scalar_lea.vmem %s3, %s182
        %s184 = smul.u32 %s17, 4
        %s185 = sadd.s32 %s184, %s18
        %s186 = smul.u32 30, %s185
      $region32: #{tpu_custom_call.1} parent=27 // pred_fallthru
        _
    $region28: #{tpu_custom_call.1} parent=5 // pred_fallthru
      _
    %p187 = scmp.le.s32.totalorder 1, %s10
    %p188 = scmp.lt.s32.totalorder %s10, 5
    %p189 = pnand %p187, %p188
    %p190 = pneg %p189
    // Predicated region
    $region33: #{tpu_custom_call.1} parent=5 // pred_check
      _
    $region34: #{tpu_custom_call.1} parent=5 // pred_check_branch
      %192 = sbr.rel (%p189) target = $region36
    $region35: #{tpu_custom_call.1} parent=5 // pred_region
      %s193 = ssub.s32 %s10, 1
      %p194 = pneg %p43
      %p195 = pneg %p40
      %p196 = pneg %p64
      %p197 = pneg %p61
      %p198 = pneg %p85
      %p199 = pneg %p82
      %s200 = smul.u32 %s19, 4
      %s201 = sadd.s32 %s200, %s20
      %s202 = smul.u32 30, %s201
      %p203 = scmp.lt.s32.totalorder %s202, 119
      %s204 = scalar_select %p203, %s202, 119
      %s205 = smul.addr %s204, 2
      %s206 = smul.addr %s205, 8
      %s207 = scalar_lea.vmem %s3, %s206
      %p208 = pneg %p115
      %p209 = pneg %p112
      %p210 = pneg %p145
      %p211 = pneg %p142
      %s212 = smul.u32 %s19, 4
      %s213 = sadd.s32 %s212, %s20
      %s214 = smul.u32 30, %s213
      %p215 = scmp.lt.s32.totalorder %s214, 119
      %s216 = scalar_select %p215, %s214, 119
      %s217 = smul.addr %s216, 2
      %s218 = smul.addr %s217, 8
      %s219 = scalar_lea.vmem %s4, %s218
      %s220 = smul.u32 %s19, 4
      %s221 = sadd.s32 %s220, %s20
      %s222 = smul.u32 30, %s221
      %p223 = scmp.lt.s32.totalorder %s222, 119
      %s224 = scalar_select %p223, %s222, 119
      %s225 = smul.addr %s224, 2
      %s226 = smul.addr %s225, 8
      %s227 = scalar_lea.vmem %s3, %s226
      %s228 = smul.u32 %s19, 4
      %s229 = sadd.s32 %s228, %s20
      %s230 = smul.u32 30, %s229
      %s231 = smul.u32 %s19, 4
      %s232 = sadd.s32 %s231, %s20
      %s233 = smul.u32 30, %s232
      %p234 = scmp.lt.s32.totalorder %s233, 119
      %s235 = scalar_select %p234, %s233, 119
      %s236 = smul.addr %s235, 2
      %s237 = smul.addr %s236, 8
      %s238 = scalar_lea.vmem %s4, %s237
      %s239 = smul.u32 %s19, 4
      %s240 = sadd.s32 %s239, %s20
      %s241 = smul.u32 30, %s240
      %p242 = scmp.eq.s32.totalorder %s20, 0
      // Predicated region
      $region37: #{tpu_custom_call.1} parent=35 // pred_check
        %p243 = pneg %p242
      $region38: #{tpu_custom_call.1} parent=35 // pred_check_branch
        %245 = sbr.rel (%p243) target = $region40
      $region39: #{tpu_custom_call.1} parent=35 // pred_region
        %v246 = vld [vmem:[%s0] sm:$0xff]
        %v247 = vld [vmem:[%s0 + $0x8] sm:$0xff]
        %v248 = vld [vmem:[%s0 + $0x10] sm:$0xff]
        %v249 = vld [vmem:[%s0 + $0x18] sm:$0xff]
        %v250 = vld [vmem:[%s0 + $0x20] sm:$0xff]
        %v251 = vld [vmem:[%s0 + $0x28] sm:$0xff]
        %v252 = vld [vmem:[%s0 + $0x30] sm:$0xff]
        %v253 = vld [vmem:[%s0 + $0x38] sm:$0xff]
        %v254 = vld [vmem:[%s0 + $0x40] sm:$0xff]
        %v255 = vld [vmem:[%s0 + $0x48] sm:$0xff]
        %v256 = vld [vmem:[%s0 + $0x50] sm:$0xff]
        %v257 = vld [vmem:[%s0 + $0x58] sm:$0xff]
        %v258 = vld [vmem:[%s0 + $0x60] sm:$0xff]
        %v259 = vld [vmem:[%s0 + $0x68] sm:$0xff]
        %v260 = vld [vmem:[%s0 + $0x70] sm:$0xff]
        %v261 = vld [vmem:[%s0 + $0x78] sm:$0xff]
        %v262 = vld [vmem:[%s0 + $0x80] sm:$0xff]
        %v263 = vld [vmem:[%s0 + $0x88] sm:$0xff]
        %v264 = vld [vmem:[%s0 + $0x90] sm:$0xff]
        %v265 = vld [vmem:[%s0 + $0x98] sm:$0xff]
        %v266 = vld [vmem:[%s0 + $0xa0] sm:$0xff]
        %v267 = vld [vmem:[%s0 + $0xa8] sm:$0xff]
        %v268 = vld [vmem:[%s0 + $0xb0] sm:$0xff]
        %v269 = vld [vmem:[%s0 + $0xb8] sm:$0xff]
        %v270 = vld [vmem:[%s0 + $0xc0] sm:$0xff]
        %v271 = vld [vmem:[%s0 + $0xc8] sm:$0xff]
        %v272 = vld [vmem:[%s0 + $0xd0] sm:$0xff]
        %v273 = vld [vmem:[%s0 + $0xd8] sm:$0xff]
        %v274 = vld [vmem:[%s0 + $0xe0] sm:$0xff]
        %v275 = vld [vmem:[%s0 + $0xe8] sm:$0xff]
        %v276 = vld [vmem:[%s0 + $0xf0] sm:$0xff]
        %v277 = vld [vmem:[%s0 + $0xf8] sm:$0xff]
        %v278 = vld [vmem:[%s0 + $0x100] sm:$0xff]
        %v279 = vld [vmem:[%s0 + $0x108] sm:$0xff]
        %v280 = vld [vmem:[%s0 + $0x110] sm:$0xff]
        %v281 = vld [vmem:[%s0 + $0x118] sm:$0xff]
        %v282 = vld [vmem:[%s0 + $0x120] sm:$0xff]
        %v283 = vld [vmem:[%s0 + $0x128] sm:$0xff]
        %v284 = vld [vmem:[%s0 + $0x130] sm:$0xff]
        %v285 = vld [vmem:[%s0 + $0x138] sm:$0xff]
        %vm286 = vcmask 556032
        %v287 = vsel %vm286, %v247, 0.0
        %v288 = vadd.f32 %v246, %v287
        %289 = vadd.xlane.f32.xlu0 %v288
        %v290 = vpop.xlane.xlu0 %289
        %v291 = vsel %vm286, %v249, 0.0
        %v292 = vadd.f32 %v248, %v291
        %293 = vadd.xlane.f32.xlu0 %v292
        %v294 = vpop.xlane.xlu0 %293
        %v295 = vsel %vm286, %v251, 0.0
        %v296 = vadd.f32 %v250, %v295
        %297 = vadd.xlane.f32.xlu0 %v296
        %v298 = vpop.xlane.xlu0 %297
        %v299 = vsel %vm286, %v253, 0.0
        %v300 = vadd.f32 %v252, %v299
        %301 = vadd.xlane.f32.xlu0 %v300
        %v302 = vpop.xlane.xlu0 %301
        %v303 = vsel %vm286, %v255, 0.0
        %v304 = vadd.f32 %v254, %v303
        %305 = vadd.xlane.f32.xlu0 %v304
        %v306 = vpop.xlane.xlu0 %305
        %v307 = vsel %vm286, %v257, 0.0
        %v308 = vadd.f32 %v256, %v307
        %309 = vadd.xlane.f32.xlu0 %v308
        %v310 = vpop.xlane.xlu0 %309
        %v311 = vsel %vm286, %v259, 0.0
        %v312 = vadd.f32 %v258, %v311
        %313 = vadd.xlane.f32.xlu0 %v312
        %v314 = vpop.xlane.xlu0 %313
        %v315 = vsel %vm286, %v261, 0.0
        %v316 = vadd.f32 %v260, %v315
        %317 = vadd.xlane.f32.xlu0 %v316
        %v318 = vpop.xlane.xlu0 %317
        %v319 = vsel %vm286, %v263, 0.0
        %v320 = vadd.f32 %v262, %v319
        %321 = vadd.xlane.f32.xlu0 %v320
        %v322 = vpop.xlane.xlu0 %321
        %v323 = vsel %vm286, %v265, 0.0
        %v324 = vadd.f32 %v264, %v323
        %325 = vadd.xlane.f32.xlu0 %v324
        %v326 = vpop.xlane.xlu0 %325
        %v327 = vsel %vm286, %v267, 0.0
        %v328 = vadd.f32 %v266, %v327
        %329 = vadd.xlane.f32.xlu0 %v328
        %v330 = vpop.xlane.xlu0 %329
        %v331 = vsel %vm286, %v269, 0.0
        %v332 = vadd.f32 %v268, %v331
        %333 = vadd.xlane.f32.xlu0 %v332
        %v334 = vpop.xlane.xlu0 %333
        %v335 = vsel %vm286, %v271, 0.0
        %v336 = vadd.f32 %v270, %v335
        %337 = vadd.xlane.f32.xlu0 %v336
        %v338 = vpop.xlane.xlu0 %337
        %v339 = vsel %vm286, %v273, 0.0
        %v340 = vadd.f32 %v272, %v339
        %341 = vadd.xlane.f32.xlu0 %v340
        %v342 = vpop.xlane.xlu0 %341
        %v343 = vsel %vm286, %v275, 0.0
        %v344 = vadd.f32 %v274, %v343
        %345 = vadd.xlane.f32.xlu0 %v344
        %v346 = vpop.xlane.xlu0 %345
        %v347 = vsel %vm286, %v277, 0.0
        %v348 = vadd.f32 %v276, %v347
        %349 = vadd.xlane.f32.xlu0 %v348
        %v350 = vpop.xlane.xlu0 %349
        %v351 = vsel %vm286, %v279, 0.0
        %v352 = vadd.f32 %v278, %v351
        %353 = vadd.xlane.f32.xlu0 %v352
        %v354 = vpop.xlane.xlu0 %353
        %v355 = vsel %vm286, %v281, 0.0
        %v356 = vadd.f32 %v280, %v355
        %357 = vadd.xlane.f32.xlu0 %v356
        %v358 = vpop.xlane.xlu0 %357
        %v359 = vsel %vm286, %v283, 0.0
        %v360 = vadd.f32 %v282, %v359
        %361 = vadd.xlane.f32.xlu0 %v360
        %v362 = vpop.xlane.xlu0 %361
        %v363 = vsel %vm286, %v285, 0.0
        %v364 = vadd.f32 %v284, %v363
        %365 = vadd.xlane.f32.xlu0 %v364
        %v366 = vpop.xlane.xlu0 %365
        %v367 = vrcp.pop 196.0
        %v368 = vmul.f32 %v290, %v367
        %v369 = vmul.f32 %v294, %v367
        %v370 = vmul.f32 %v298, %v367
        %v371 = vmul.f32 %v302, %v367
        %v372 = vmul.f32 %v306, %v367
        %v373 = vmul.f32 %v310, %v367
        %v374 = vmul.f32 %v314, %v367
        %v375 = vmul.f32 %v318, %v367
        %v376 = vmul.f32 %v322, %v367
        %v377 = vmul.f32 %v326, %v367
        %v378 = vmul.f32 %v330, %v367
        %v379 = vmul.f32 %v334, %v367
        %v380 = vmul.f32 %v338, %v367
        %v381 = vmul.f32 %v342, %v367
        %v382 = vmul.f32 %v346, %v367
        %v383 = vmul.f32 %v350, %v367
        %v384 = vmul.f32 %v354, %v367
        %v385 = vmul.f32 %v358, %v367
        %v386 = vmul.f32 %v362, %v367
        %v387 = vmul.f32 %v366, %v367
        %v388 = vsub.f32 %v246, %v368
        %v389 = vsub.f32 %v247, %v368
        %v390 = vsub.f32 %v248, %v369
        %v391 = vsub.f32 %v249, %v369
        %v392 = vsub.f32 %v250, %v370
        %v393 = vsub.f32 %v251, %v370
        %v394 = vsub.f32 %v252, %v371
        %v395 = vsub.f32 %v253, %v371
        %v396 = vsub.f32 %v254, %v372
        %v397 = vsub.f32 %v255, %v372
        %v398 = vsub.f32 %v256, %v373
        %v399 = vsub.f32 %v257, %v373
        %v400 = vsub.f32 %v258, %v374
        %v401 = vsub.f32 %v259, %v374
        %v402 = vsub.f32 %v260, %v375
        %v403 = vsub.f32 %v261, %v375
        %v404 = vsub.f32 %v262, %v376
        %v405 = vsub.f32 %v263, %v376
        %v406 = vsub.f32 %v264, %v377
        %v407 = vsub.f32 %v265, %v377
        %v408 = vsub.f32 %v266, %v378
        %v409 = vsub.f32 %v267, %v378
        %v410 = vsub.f32 %v268, %v379
        %v411 = vsub.f32 %v269, %v379
        %v412 = vsub.f32 %v270, %v380
        %v413 = vsub.f32 %v271, %v380
        %v414 = vsub.f32 %v272, %v381
        %v415 = vsub.f32 %v273, %v381
        %v416 = vsub.f32 %v274, %v382
        %v417 = vsub.f32 %v275, %v382
        %v418 = vsub.f32 %v276, %v383
        %v419 = vsub.f32 %v277, %v383
        %v420 = vsub.f32 %v278, %v384
        %v421 = vsub.f32 %v279, %v384
        %v422 = vsub.f32 %v280, %v385
        %v423 = vsub.f32 %v281, %v385
        %v424 = vsub.f32 %v282, %v386
        %v425 = vsub.f32 %v283, %v386
        %v426 = vsub.f32 %v284, %v387
        %v427 = vsub.f32 %v285, %v387
        %v428 = vmul.f32 %v388, %v388
        %v429 = vmul.f32 %v389, %v389
        %v430 = vmul.f32 %v390, %v390
        %v431 = vmul.f32 %v391, %v391
        %v432 = vmul.f32 %v392, %v392
        %v433 = vmul.f32 %v393, %v393
        %v434 = vmul.f32 %v394, %v394
        %v435 = vmul.f32 %v395, %v395
        %v436 = vmul.f32 %v396, %v396
        %v437 = vmul.f32 %v397, %v397
        %v438 = vmul.f32 %v398, %v398
        %v439 = vmul.f32 %v399, %v399
        %v440 = vmul.f32 %v400, %v400
        %v441 = vmul.f32 %v401, %v401
        %v442 = vmul.f32 %v402, %v402
        %v443 = vmul.f32 %v403, %v403
        %v444 = vmul.f32 %v404, %v404
        %v445 = vmul.f32 %v405, %v405
        %v446 = vmul.f32 %v406, %v406
        %v447 = vmul.f32 %v407, %v407
        %v448 = vmul.f32 %v408, %v408
        %v449 = vmul.f32 %v409, %v409
        %v450 = vmul.f32 %v410, %v410
        %v451 = vmul.f32 %v411, %v411
        %v452 = vmul.f32 %v412, %v412
        %v453 = vmul.f32 %v413, %v413
        %v454 = vmul.f32 %v414, %v414
        %v455 = vmul.f32 %v415, %v415
        %v456 = vmul.f32 %v416, %v416
        %v457 = vmul.f32 %v417, %v417
        %v458 = vmul.f32 %v418, %v418
        %v459 = vmul.f32 %v419, %v419
        %v460 = vmul.f32 %v420, %v420
        %v461 = vmul.f32 %v421, %v421
        %v462 = vmul.f32 %v422, %v422
        %v463 = vmul.f32 %v423, %v423
        %v464 = vmul.f32 %v424, %v424
        %v465 = vmul.f32 %v425, %v425
        %v466 = vmul.f32 %v426, %v426
        %v467 = vmul.f32 %v427, %v427
        %v468 = vsel %vm286, %v429, 0.0
        %v469 = vadd.f32 %v428, %v468
        %470 = vadd.xlane.f32.xlu0 %v469
        %v471 = vpop.xlane.xlu0 %470
        %v472 = vsel %vm286, %v431, 0.0
        %v473 = vadd.f32 %v430, %v472
        %474 = vadd.xlane.f32.xlu0 %v473
        %v475 = vpop.xlane.xlu0 %474
        %v476 = vsel %vm286, %v433, 0.0
        %v477 = vadd.f32 %v432, %v476
        %478 = vadd.xlane.f32.xlu0 %v477
        %v479 = vpop.xlane.xlu0 %478
        %v480 = vsel %vm286, %v435, 0.0
        %v481 = vadd.f32 %v434, %v480
        %482 = vadd.xlane.f32.xlu0 %v481
        %v483 = vpop.xlane.xlu0 %482
        %v484 = vsel %vm286, %v437, 0.0
        %v485 = vadd.f32 %v436, %v484
        %486 = vadd.xlane.f32.xlu0 %v485
        %v487 = vpop.xlane.xlu0 %486
        %v488 = vsel %vm286, %v439, 0.0
        %v489 = vadd.f32 %v438, %v488
        %490 = vadd.xlane.f32.xlu0 %v489
        %v491 = vpop.xlane.xlu0 %490
        %v492 = vsel %vm286, %v441, 0.0
        %v493 = vadd.f32 %v440, %v492
        %494 = vadd.xlane.f32.xlu0 %v493
        %v495 = vpop.xlane.xlu0 %494
        %v496 = vsel %vm286, %v443, 0.0
        %v497 = vadd.f32 %v442, %v496
        %498 = vadd.xlane.f32.xlu0 %v497
        %v499 = vpop.xlane.xlu0 %498
        %v500 = vsel %vm286, %v445, 0.0
        %v501 = vadd.f32 %v444, %v500
        %502 = vadd.xlane.f32.xlu0 %v501
        %v503 = vpop.xlane.xlu0 %502
        %v504 = vsel %vm286, %v447, 0.0
        %v505 = vadd.f32 %v446, %v504
        %506 = vadd.xlane.f32.xlu0 %v505
        %v507 = vpop.xlane.xlu0 %506
        %v508 = vsel %vm286, %v449, 0.0
        %v509 = vadd.f32 %v448, %v508
        %510 = vadd.xlane.f32.xlu0 %v509
        %v511 = vpop.xlane.xlu0 %510
        %v512 = vsel %vm286, %v451, 0.0
        %v513 = vadd.f32 %v450, %v512
        %514 = vadd.xlane.f32.xlu0 %v513
        %v515 = vpop.xlane.xlu0 %514
        %v516 = vsel %vm286, %v453, 0.0
        %v517 = vadd.f32 %v452, %v516
        %518 = vadd.xlane.f32.xlu0 %v517
        %v519 = vpop.xlane.xlu0 %518
        %v520 = vsel %vm286, %v455, 0.0
        %v521 = vadd.f32 %v454, %v520
        %522 = vadd.xlane.f32.xlu0 %v521
        %v523 = vpop.xlane.xlu0 %522
        %v524 = vsel %vm286, %v457, 0.0
        %v525 = vadd.f32 %v456, %v524
        %526 = vadd.xlane.f32.xlu0 %v525
        %v527 = vpop.xlane.xlu0 %526
        %v528 = vsel %vm286, %v459, 0.0
        %v529 = vadd.f32 %v458, %v528
        %530 = vadd.xlane.f32.xlu0 %v529
        %v531 = vpop.xlane.xlu0 %530
        %v532 = vsel %vm286, %v461, 0.0
        %v533 = vadd.f32 %v460, %v532
        %534 = vadd.xlane.f32.xlu0 %v533
        %v535 = vpop.xlane.xlu0 %534
        %v536 = vsel %vm286, %v463, 0.0
        %v537 = vadd.f32 %v462, %v536
        %538 = vadd.xlane.f32.xlu0 %v537
        %v539 = vpop.xlane.xlu0 %538
        %v540 = vsel %vm286, %v465, 0.0
        %v541 = vadd.f32 %v464, %v540
        %542 = vadd.xlane.f32.xlu0 %v541
        %v543 = vpop.xlane.xlu0 %542
        %v544 = vsel %vm286, %v467, 0.0
        %v545 = vadd.f32 %v466, %v544
        %546 = vadd.xlane.f32.xlu0 %v545
        %v547 = vpop.xlane.xlu0 %546
        %v548 = vmul.f32 %v471, %v367
        %v549 = vmul.f32 %v475, %v367
        %v550 = vmul.f32 %v479, %v367
        %v551 = vmul.f32 %v483, %v367
        %v552 = vmul.f32 %v487, %v367
        %v553 = vmul.f32 %v491, %v367
        %v554 = vmul.f32 %v495, %v367
        %v555 = vmul.f32 %v499, %v367
        %v556 = vmul.f32 %v503, %v367
        %v557 = vmul.f32 %v507, %v367
        %v558 = vmul.f32 %v511, %v367
        %v559 = vmul.f32 %v515, %v367
        %v560 = vmul.f32 %v519, %v367
        %v561 = vmul.f32 %v523, %v367
        %v562 = vmul.f32 %v527, %v367
        %v563 = vmul.f32 %v531, %v367
        %v564 = vmul.f32 %v535, %v367
        %v565 = vmul.f32 %v539, %v367
        %v566 = vmul.f32 %v543, %v367
        %v567 = vmul.f32 %v547, %v367
        %v568 = vld [vmem:[%s2] sm:$0xff]
        %v569 = vld [vmem:[%s2 + $0x8] sm:$0xff]
        %v570 = vld [vmem:[%s2 + $0x10] sm:$0xff]
        %v571 = vld [vmem:[%s2 + $0x18] sm:$0xff]
        %v572 = vld [vmem:[%s2 + $0x20] sm:$0xff]
        %v573 = vld [vmem:[%s2 + $0x28] sm:$0xff]
        %v574 = vld [vmem:[%s2 + $0x30] sm:$0xff]
        %v575 = vld [vmem:[%s2 + $0x38] sm:$0xff]
        %v576 = vld [vmem:[%s2 + $0x40] sm:$0xff]
        %v577 = vld [vmem:[%s2 + $0x48] sm:$0xff]
        %v578 = vld [vmem:[%s2 + $0x50] sm:$0xff]
        %v579 = vld [vmem:[%s2 + $0x58] sm:$0xff]
        %v580 = vld [vmem:[%s2 + $0x60] sm:$0xff]
        %v581 = vld [vmem:[%s2 + $0x68] sm:$0xff]
        %v582 = vld [vmem:[%s2 + $0x70] sm:$0xff]
        %v583 = vld [vmem:[%s2 + $0x78] sm:$0xff]
        %v584 = vld [vmem:[%s2 + $0x80] sm:$0xff]
        %v585 = vld [vmem:[%s2 + $0x88] sm:$0xff]
        %v586 = vld [vmem:[%s2 + $0x90] sm:$0xff]
        %v587 = vld [vmem:[%s2 + $0x98] sm:$0xff]
        %v588 = vadd.f32 %v548, 1e-05
        %v589 = vadd.f32 %v549, 1e-05
        %v590 = vadd.f32 %v550, 1e-05
        %v591 = vadd.f32 %v551, 1e-05
        %v592 = vadd.f32 %v552, 1e-05
        %v593 = vadd.f32 %v553, 1e-05
        %v594 = vadd.f32 %v554, 1e-05
        %v595 = vadd.f32 %v555, 1e-05
        %v596 = vadd.f32 %v556, 1e-05
        %v597 = vadd.f32 %v557, 1e-05
        %v598 = vadd.f32 %v558, 1e-05
        %v599 = vadd.f32 %v559, 1e-05
        %v600 = vadd.f32 %v560, 1e-05
        %v601 = vadd.f32 %v561, 1e-05
        %v602 = vadd.f32 %v562, 1e-05
        %v603 = vadd.f32 %v563, 1e-05
        %v604 = vadd.f32 %v564, 1e-05
        %v605 = vadd.f32 %v565, 1e-05
        %v606 = vadd.f32 %v566, 1e-05
        %v607 = vadd.f32 %v567, 1e-05
        %v608 = vrsqrt.pop %v588
        %v609 = vrsqrt.pop %v589
        %v610 = vrsqrt.pop %v590
        %v611 = vrsqrt.pop %v591
        %v612 = vrsqrt.pop %v592
        %v613 = vrsqrt.pop %v593
        %v614 = vrsqrt.pop %v594
        %v615 = vrsqrt.pop %v595
        %v616 = vrsqrt.pop %v596
        %v617 = vrsqrt.pop %v597
        %v618 = vrsqrt.pop %v598
        %v619 = vrsqrt.pop %v599
        %v620 = vrsqrt.pop %v600
        %v621 = vrsqrt.pop %v601
        %v622 = vrsqrt.pop %v602
        %v623 = vrsqrt.pop %v603
        %v624 = vrsqrt.pop %v604
        %v625 = vrsqrt.pop %v605
        %v626 = vrsqrt.pop %v606
        %v627 = vrsqrt.pop %v607
        %v628 = vmul.f32 %v608, %v568
        %v629 = vmul.f32 %v609, %v569
        %v630 = vmul.f32 %v610, %v570
        %v631 = vmul.f32 %v611, %v571
        %v632 = vmul.f32 %v612, %v572
        %v633 = vmul.f32 %v613, %v573
        %v634 = vmul.f32 %v614, %v574
        %v635 = vmul.f32 %v615, %v575
        %v636 = vmul.f32 %v616, %v576
        %v637 = vmul.f32 %v617, %v577
        %v638 = vmul.f32 %v618, %v578
        %v639 = vmul.f32 %v619, %v579
        %v640 = vmul.f32 %v620, %v580
        %v641 = vmul.f32 %v621, %v581
        %v642 = vmul.f32 %v622, %v582
        %v643 = vmul.f32 %v623, %v583
        %v644 = vmul.f32 %v624, %v584
        %v645 = vmul.f32 %v625, %v585
        %v646 = vmul.f32 %v626, %v586
        %v647 = vmul.f32 %v627, %v587
        %649 = vset.pattern.permute.xlu0 0
        %650 = vperm.xlu0 %649, %v628
        %v651 = vpop.permute.xlu0 %650
        %654 = vset.pattern.permute.xlu0 0
        %655 = vperm.xlu0 %654, %v629
        %v656 = vpop.permute.xlu0 %655
        %659 = vset.pattern.permute.xlu0 0
        %660 = vperm.xlu0 %659, %v630
        %v661 = vpop.permute.xlu0 %660
        %664 = vset.pattern.permute.xlu0 0
        %665 = vperm.xlu0 %664, %v631
        %v666 = vpop.permute.xlu0 %665
        %669 = vset.pattern.permute.xlu0 0
        %670 = vperm.xlu0 %669, %v632
        %v671 = vpop.permute.xlu0 %670
        %674 = vset.pattern.permute.xlu0 0
        %675 = vperm.xlu0 %674, %v633
        %v676 = vpop.permute.xlu0 %675
        %679 = vset.pattern.permute.xlu0 0
        %680 = vperm.xlu0 %679, %v634
        %v681 = vpop.permute.xlu0 %680
        %684 = vset.pattern.permute.xlu0 0
        %685 = vperm.xlu0 %684, %v635
        %v686 = vpop.permute.xlu0 %685
        %689 = vset.pattern.permute.xlu0 0
        %690 = vperm.xlu0 %689, %v636
        %v691 = vpop.permute.xlu0 %690
        %694 = vset.pattern.permute.xlu0 0
        %695 = vperm.xlu0 %694, %v637
        %v696 = vpop.permute.xlu0 %695
        %699 = vset.pattern.permute.xlu0 0
        %700 = vperm.xlu0 %699, %v638
        %v701 = vpop.permute.xlu0 %700
        %704 = vset.pattern.permute.xlu0 0
        %705 = vperm.xlu0 %704, %v639
        %v706 = vpop.permute.xlu0 %705
        %709 = vset.pattern.permute.xlu0 0
        %710 = vperm.xlu0 %709, %v640
        %v711 = vpop.permute.xlu0 %710
        %714 = vset.pattern.permute.xlu0 0
        %715 = vperm.xlu0 %714, %v641
        %v716 = vpop.permute.xlu0 %715
        %719 = vset.pattern.permute.xlu0 0
        %720 = vperm.xlu0 %719, %v642
        %v721 = vpop.permute.xlu0 %720
        %724 = vset.pattern.permute.xlu0 0
        %725 = vperm.xlu0 %724, %v643
        %v726 = vpop.permute.xlu0 %725
        %729 = vset.pattern.permute.xlu0 0
        %730 = vperm.xlu0 %729, %v644
        %v731 = vpop.permute.xlu0 %730
        %734 = vset.pattern.permute.xlu0 0
        %735 = vperm.xlu0 %734, %v645
        %v736 = vpop.permute.xlu0 %735
        %739 = vset.pattern.permute.xlu0 0
        %740 = vperm.xlu0 %739, %v646
        %v741 = vpop.permute.xlu0 %740
        %744 = vset.pattern.permute.xlu0 0
        %745 = vperm.xlu0 %744, %v647
        %v746 = vpop.permute.xlu0 %745
        %v748 = vmul.f32 %v388, %v651
        %v749 = vmul.f32 %v389, %v651
        %v750 = vmul.f32 %v390, %v656
        %v751 = vmul.f32 %v391, %v656
        %v752 = vmul.f32 %v392, %v661
        %v753 = vmul.f32 %v393, %v661
        %v754 = vmul.f32 %v394, %v666
        %v755 = vmul.f32 %v395, %v666
        %v756 = vmul.f32 %v396, %v671
        %v757 = vmul.f32 %v397, %v671
        %v758 = vmul.f32 %v398, %v676
        %v759 = vmul.f32 %v399, %v676
        %v760 = vmul.f32 %v400, %v681
        %v761 = vmul.f32 %v401, %v681
        %v762 = vmul.f32 %v402, %v686
        %v763 = vmul.f32 %v403, %v686
        %v764 = vmul.f32 %v404, %v691
        %v765 = vmul.f32 %v405, %v691
        %v766 = vmul.f32 %v406, %v696
        %v767 = vmul.f32 %v407, %v696
        %v768 = vmul.f32 %v408, %v701
        %v769 = vmul.f32 %v409, %v701
        %v770 = vmul.f32 %v410, %v706
        %v771 = vmul.f32 %v411, %v706
        %v772 = vmul.f32 %v412, %v711
        %v773 = vmul.f32 %v413, %v711
        %v774 = vmul.f32 %v414, %v716
        %v775 = vmul.f32 %v415, %v716
        %v776 = vmul.f32 %v416, %v721
        %v777 = vmul.f32 %v417, %v721
        %v778 = vmul.f32 %v418, %v726
        %v779 = vmul.f32 %v419, %v726
        %v780 = vmul.f32 %v420, %v731
        %v781 = vmul.f32 %v421, %v731
        %v782 = vmul.f32 %v422, %v736
        %v783 = vmul.f32 %v423, %v736
        %v784 = vmul.f32 %v424, %v741
        %v785 = vmul.f32 %v425, %v741
        %v786 = vmul.f32 %v426, %v746
        %v787 = vmul.f32 %v427, %v746
        %789 = vset.pattern.permute.xlu0 1
        %790 = vperm.xlu0 %789, %v568
        %v791 = vpop.permute.xlu0 %790
        %794 = vset.pattern.permute.xlu0 1
        %795 = vperm.xlu0 %794, %v569
        %v796 = vpop.permute.xlu0 %795
        %799 = vset.pattern.permute.xlu0 1
        %800 = vperm.xlu0 %799, %v570
        %v801 = vpop.permute.xlu0 %800
        %804 = vset.pattern.permute.xlu0 1
        %805 = vperm.xlu0 %804, %v571
        %v806 = vpop.permute.xlu0 %805
        %809 = vset.pattern.permute.xlu0 1
        %810 = vperm.xlu0 %809, %v572
        %v811 = vpop.permute.xlu0 %810
        %814 = vset.pattern.permute.xlu0 1
        %815 = vperm.xlu0 %814, %v573
        %v816 = vpop.permute.xlu0 %815
        %819 = vset.pattern.permute.xlu0 1
        %820 = vperm.xlu0 %819, %v574
        %v821 = vpop.permute.xlu0 %820
        %824 = vset.pattern.permute.xlu0 1
        %825 = vperm.xlu0 %824, %v575
        %v826 = vpop.permute.xlu0 %825
        %829 = vset.pattern.permute.xlu0 1
        %830 = vperm.xlu0 %829, %v576
        %v831 = vpop.permute.xlu0 %830
        %834 = vset.pattern.permute.xlu0 1
        %835 = vperm.xlu0 %834, %v577
        %v836 = vpop.permute.xlu0 %835
        %839 = vset.pattern.permute.xlu0 1
        %840 = vperm.xlu0 %839, %v578
        %v841 = vpop.permute.xlu0 %840
        %844 = vset.pattern.permute.xlu0 1
        %845 = vperm.xlu0 %844, %v579
        %v846 = vpop.permute.xlu0 %845
        %849 = vset.pattern.permute.xlu0 1
        %850 = vperm.xlu0 %849, %v580
        %v851 = vpop.permute.xlu0 %850
        %854 = vset.pattern.permute.xlu0 1
        %855 = vperm.xlu0 %854, %v581
        %v856 = vpop.permute.xlu0 %855
        %859 = vset.pattern.permute.xlu0 1
        %860 = vperm.xlu0 %859, %v582
        %v861 = vpop.permute.xlu0 %860
        %864 = vset.pattern.permute.xlu0 1
        %865 = vperm.xlu0 %864, %v583
        %v866 = vpop.permute.xlu0 %865
        %869 = vset.pattern.permute.xlu0 1
        %870 = vperm.xlu0 %869, %v584
        %v871 = vpop.permute.xlu0 %870
        %874 = vset.pattern.permute.xlu0 1
        %875 = vperm.xlu0 %874, %v585
        %v876 = vpop.permute.xlu0 %875
        %879 = vset.pattern.permute.xlu0 1
        %880 = vperm.xlu0 %879, %v586
        %v881 = vpop.permute.xlu0 %880
        %884 = vset.pattern.permute.xlu0 1
        %885 = vperm.xlu0 %884, %v587
        %v886 = vpop.permute.xlu0 %885
        %v888 = vadd.f32 %v748, %v791
        %v889 = vadd.f32 %v749, %v791
        %v890 = vadd.f32 %v750, %v796
        %v891 = vadd.f32 %v751, %v796
        %v892 = vadd.f32 %v752, %v801
        %v893 = vadd.f32 %v753, %v801
        %v894 = vadd.f32 %v754, %v806
        %v895 = vadd.f32 %v755, %v806
        %v896 = vadd.f32 %v756, %v811
        %v897 = vadd.f32 %v757, %v811
        %v898 = vadd.f32 %v758, %v816
        %v899 = vadd.f32 %v759, %v816
        %v900 = vadd.f32 %v760, %v821
        %v901 = vadd.f32 %v761, %v821
        %v902 = vadd.f32 %v762, %v826
        %v903 = vadd.f32 %v763, %v826
        %v904 = vadd.f32 %v764, %v831
        %v905 = vadd.f32 %v765, %v831
        %v906 = vadd.f32 %v766, %v836
        %v907 = vadd.f32 %v767, %v836
        %v908 = vadd.f32 %v768, %v841
        %v909 = vadd.f32 %v769, %v841
        %v910 = vadd.f32 %v770, %v846
        %v911 = vadd.f32 %v771, %v846
        %v912 = vadd.f32 %v772, %v851
        %v913 = vadd.f32 %v773, %v851
        %v914 = vadd.f32 %v774, %v856
        %v915 = vadd.f32 %v775, %v856
        %v916 = vadd.f32 %v776, %v861
        %v917 = vadd.f32 %v777, %v861
        %v918 = vadd.f32 %v778, %v866
        %v919 = vadd.f32 %v779, %v866
        %v920 = vadd.f32 %v780, %v871
        %v921 = vadd.f32 %v781, %v871
        %v922 = vadd.f32 %v782, %v876
        %v923 = vadd.f32 %v783, %v876
        %v924 = vadd.f32 %v784, %v881
        %v925 = vadd.f32 %v785, %v881
        %v926 = vadd.f32 %v786, %v886
        %v927 = vadd.f32 %v787, %v886
        %v928 = vld [vmem:[%s1] sm:$0xff]
        %v929 = vld [vmem:[%s1 + $0x8] sm:$0xff]
        %v930 = vld [vmem:[%s1 + $0x10] sm:$0xff]
        %v931 = vld [vmem:[%s1 + $0x18] sm:$0xff]
        %v932 = vld [vmem:[%s1 + $0x20] sm:$0xff]
        %v933 = vld [vmem:[%s1 + $0x28] sm:$0xff]
        %v934 = vld [vmem:[%s1 + $0x30] sm:$0xff]
        %v935 = vld [vmem:[%s1 + $0x38] sm:$0xff]
        %v936 = vld [vmem:[%s1 + $0x40] sm:$0xff]
        %v937 = vld [vmem:[%s1 + $0x48] sm:$0xff]
        %v938 = vld [vmem:[%s1 + $0x50] sm:$0xff]
        %v939 = vld [vmem:[%s1 + $0x58] sm:$0xff]
        %v940 = vld [vmem:[%s1 + $0x60] sm:$0xff]
        %v941 = vld [vmem:[%s1 + $0x68] sm:$0xff]
        %v942 = vld [vmem:[%s1 + $0x70] sm:$0xff]
        %v943 = vld [vmem:[%s1 + $0x78] sm:$0xff]
        %v944 = vld [vmem:[%s1 + $0x80] sm:$0xff]
        %v945 = vld [vmem:[%s1 + $0x88] sm:$0xff]
        %v946 = vld [vmem:[%s1 + $0x90] sm:$0xff]
        %v947 = vld [vmem:[%s1 + $0x98] sm:$0xff]
        %v948 = vld [vmem:[%s1 + $0xa0] sm:$0xff]
        %v949 = vld [vmem:[%s1 + $0xa8] sm:$0xff]
        %v950 = vld [vmem:[%s1 + $0xb0] sm:$0xff]
        %v951 = vld [vmem:[%s1 + $0xb8] sm:$0xff]
        %v952 = vld [vmem:[%s1 + $0xc0] sm:$0xff]
        %v953 = vld [vmem:[%s1 + $0xc8] sm:$0xff]
        %v954 = vld [vmem:[%s1 + $0xd0] sm:$0xff]
        %v955 = vld [vmem:[%s1 + $0xd8] sm:$0xff]
        %v956 = vld [vmem:[%s1 + $0xe0] sm:$0xff]
        %v957 = vld [vmem:[%s1 + $0xe8] sm:$0xff]
        %v958 = vld [vmem:[%s1 + $0xf0] sm:$0xff]
        %v959 = vld [vmem:[%s1 + $0xf8] sm:$0xff]
        %v960 = vld [vmem:[%s1 + $0x100] sm:$0xff]
        %v961 = vld [vmem:[%s1 + $0x108] sm:$0xff]
        %v962 = vld [vmem:[%s1 + $0x110] sm:$0xff]
        %v963 = vld [vmem:[%s1 + $0x118] sm:$0xff]
        %v964 = vld [vmem:[%s1 + $0x120] sm:$0xff]
        %v965 = vld [vmem:[%s1 + $0x128] sm:$0xff]
        %v966 = vld [vmem:[%s1 + $0x130] sm:$0xff]
        %v967 = vld [vmem:[%s1 + $0x138] sm:$0xff]
        %v968 = vadd.f32 %v888, %v928
        %v969 = vadd.f32 %v889, %v929
        %v970 = vadd.f32 %v890, %v930
        %v971 = vadd.f32 %v891, %v931
        %v972 = vadd.f32 %v892, %v932
        %v973 = vadd.f32 %v893, %v933
        %v974 = vadd.f32 %v894, %v934
        %v975 = vadd.f32 %v895, %v935
        %v976 = vadd.f32 %v896, %v936
        %v977 = vadd.f32 %v897, %v937
        %v978 = vadd.f32 %v898, %v938
        %v979 = vadd.f32 %v899, %v939
        %v980 = vadd.f32 %v900, %v940
        %v981 = vadd.f32 %v901, %v941
        %v982 = vadd.f32 %v902, %v942
        %v983 = vadd.f32 %v903, %v943
        %v984 = vadd.f32 %v904, %v944
        %v985 = vadd.f32 %v905, %v945
        %v986 = vadd.f32 %v906, %v946
        %v987 = vadd.f32 %v907, %v947
        %v988 = vadd.f32 %v908, %v948
        %v989 = vadd.f32 %v909, %v949
        %v990 = vadd.f32 %v910, %v950
        %v991 = vadd.f32 %v911, %v951
        %v992 = vadd.f32 %v912, %v952
        %v993 = vadd.f32 %v913, %v953
        %v994 = vadd.f32 %v914, %v954
        %v995 = vadd.f32 %v915, %v955
        %v996 = vadd.f32 %v916, %v956
        %v997 = vadd.f32 %v917, %v957
        %v998 = vadd.f32 %v918, %v958
        %v999 = vadd.f32 %v919, %v959
        %v1000 = vadd.f32 %v920, %v960
        %v1001 = vadd.f32 %v921, %v961
        %v1002 = vadd.f32 %v922, %v962
        %v1003 = vadd.f32 %v923, %v963
        %v1004 = vadd.f32 %v924, %v964
        %v1005 = vadd.f32 %v925, %v965
        %v1006 = vadd.f32 %v926, %v966
        %v1007 = vadd.f32 %v927, %v967
        %1008 = vst [vmem:[#allocation2] sm:$0xff] %v968
        %1009 = vst.msk [vmem:[#allocation2 + $0x8] sm:$0xff] %vm286, %v969
        %1010 = vst [vmem:[#allocation2 + $0x10] sm:$0xff] %v970
        %1011 = vst.msk [vmem:[#allocation2 + $0x18] sm:$0xff] %vm286, %v971
        %1012 = vst [vmem:[#allocation2 + $0x20] sm:$0xff] %v972
        %1013 = vst.msk [vmem:[#allocation2 + $0x28] sm:$0xff] %vm286, %v973
        %1014 = vst [vmem:[#allocation2 + $0x30] sm:$0xff] %v974
        %1015 = vst.msk [vmem:[#allocation2 + $0x38] sm:$0xff] %vm286, %v975
        %1016 = vst [vmem:[#allocation2 + $0x40] sm:$0xff] %v976
        %1017 = vst.msk [vmem:[#allocation2 + $0x48] sm:$0xff] %vm286, %v977
        %1018 = vst [vmem:[#allocation2 + $0x50] sm:$0xff] %v978
        %1019 = vst.msk [vmem:[#allocation2 + $0x58] sm:$0xff] %vm286, %v979
        %1020 = vst [vmem:[#allocation2 + $0x60] sm:$0xff] %v980
        %1021 = vst.msk [vmem:[#allocation2 + $0x68] sm:$0xff] %vm286, %v981
        %1022 = vst [vmem:[#allocation2 + $0x70] sm:$0xff] %v982
        %1023 = vst.msk [vmem:[#allocation2 + $0x78] sm:$0xff] %vm286, %v983
        %1024 = vst [vmem:[#allocation2 + $0x80] sm:$0xff] %v984
        %1025 = vst.msk [vmem:[#allocation2 + $0x88] sm:$0xff] %vm286, %v985
        %1026 = vst [vmem:[#allocation2 + $0x90] sm:$0xff] %v986
        %1027 = vst.msk [vmem:[#allocation2 + $0x98] sm:$0xff] %vm286, %v987
        %1028 = vst [vmem:[#allocation2 + $0xa0] sm:$0xff] %v988
        %1029 = vst.msk [vmem:[#allocation2 + $0xa8] sm:$0xff] %vm286, %v989
        %1030 = vst [vmem:[#allocation2 + $0xb0] sm:$0xff] %v990
        %1031 = vst.msk [vmem:[#allocation2 + $0xb8] sm:$0xff] %vm286, %v991
        %1032 = vst [vmem:[#allocation2 + $0xc0] sm:$0xff] %v992
        %1033 = vst.msk [vmem:[#allocation2 + $0xc8] sm:$0xff] %vm286, %v993
        %1034 = vst [vmem:[#allocation2 + $0xd0] sm:$0xff] %v994
        %1035 = vst.msk [vmem:[#allocation2 + $0xd8] sm:$0xff] %vm286, %v995
        %1036 = vst [vmem:[#allocation2 + $0xe0] sm:$0xff] %v996
        %1037 = vst.msk [vmem:[#allocation2 + $0xe8] sm:$0xff] %vm286, %v997
        %1038 = vst [vmem:[#allocation2 + $0xf0] sm:$0xff] %v998
        %1039 = vst.msk [vmem:[#allocation2 + $0xf8] sm:$0xff] %vm286, %v999
        %1040 = vst [vmem:[#allocation2 + $0x100] sm:$0xff] %v1000
        %1041 = vst.msk [vmem:[#allocation2 + $0x108] sm:$0xff] %vm286, %v1001
        %1042 = vst [vmem:[#allocation2 + $0x110] sm:$0xff] %v1002
        %1043 = vst.msk [vmem:[#allocation2 + $0x118] sm:$0xff] %vm286, %v1003
        %1044 = vst [vmem:[#allocation2 + $0x120] sm:$0xff] %v1004
        %1045 = vst.msk [vmem:[#allocation2 + $0x128] sm:$0xff] %vm286, %v1005
        %1046 = vst [vmem:[#allocation2 + $0x130] sm:$0xff] %v1006
        %1047 = vst.msk [vmem:[#allocation2 + $0x138] sm:$0xff] %vm286, %v1007
      $region40: #{tpu_custom_call.1} parent=35 // pred_fallthru
        _
      %v1048 = vld [vmem:[%s227] sm:$0xff]
      %v1049 = vld [vmem:[%s227 + $0x8] sm:$0xff]
      %v1050 = vld [vmem:[%s227 + $0x10] sm:$0xff]
      %v1051 = vld [vmem:[%s227 + $0x18] sm:$0xff]
      %v1052 = vld [vmem:[%s227 + $0x20] sm:$0xff]
      %v1053 = vld [vmem:[%s227 + $0x28] sm:$0xff]
      %v1054 = vld [vmem:[%s227 + $0x30] sm:$0xff]
      %v1055 = vld [vmem:[%s227 + $0x38] sm:$0xff]
      %v1056 = vld [vmem:[%s227 + $0x40] sm:$0xff]
      %v1057 = vld [vmem:[%s227 + $0x48] sm:$0xff]
      %v1058 = vld [vmem:[%s227 + $0x50] sm:$0xff]
      %v1059 = vld [vmem:[%s227 + $0x58] sm:$0xff]
      %v1060 = vld [vmem:[%s227 + $0x60] sm:$0xff]
      %v1061 = vld [vmem:[%s227 + $0x68] sm:$0xff]
      %v1062 = vld [vmem:[%s227 + $0x70] sm:$0xff]
      %v1063 = vld [vmem:[%s227 + $0x78] sm:$0xff]
      %v1064 = vld [vmem:[%s227 + $0x80] sm:$0xff]
      %v1065 = vld [vmem:[%s227 + $0x88] sm:$0xff]
      %v1066 = vld [vmem:[%s227 + $0x90] sm:$0xff]
      %v1067 = vld [vmem:[%s227 + $0x98] sm:$0xff]
      %v1068 = vld [vmem:[%s227 + $0xa0] sm:$0xff]
      %v1069 = vld [vmem:[%s227 + $0xa8] sm:$0xff]
      %v1070 = vld [vmem:[%s227 + $0xb0] sm:$0xff]
      %v1071 = vld [vmem:[%s227 + $0xb8] sm:$0xff]
      %v1072 = vld [vmem:[%s227 + $0xc0] sm:$0xff]
      %v1073 = vld [vmem:[%s227 + $0xc8] sm:$0xff]
      %v1074 = vld [vmem:[%s227 + $0xd0] sm:$0xff]
      %v1075 = vld [vmem:[%s227 + $0xd8] sm:$0xff]
      %v1076 = vld [vmem:[%s227 + $0xe0] sm:$0xff]
      %v1077 = vld [vmem:[%s227 + $0xe8] sm:$0xff]
      %v1078 = vld [vmem:[%s227 + $0xf0] sm:$0xff]
      %v1079 = vld [vmem:[%s227 + $0xf8] sm:$0xff]
      %v1080 = vld [vmem:[%s227 + $0x100] sm:$0xff]
      %v1081 = vld [vmem:[%s227 + $0x108] sm:$0xff]
      %v1082 = vld [vmem:[%s227 + $0x110] sm:$0xff]
      %v1083 = vld [vmem:[%s227 + $0x118] sm:$0xff]
      %v1084 = vld [vmem:[%s227 + $0x120] sm:$0xff]
      %v1085 = vld [vmem:[%s227 + $0x128] sm:$0xff]
      %v1086 = vld [vmem:[%s227 + $0x130] sm:$0xff]
      %v1087 = vld [vmem:[%s227 + $0x138] sm:$0xff]
      %v1088 = vld [vmem:[%s227 + $0x140] sm:$0xff]
      %v1089 = vld [vmem:[%s227 + $0x148] sm:$0xff]
      %v1090 = vld [vmem:[%s227 + $0x150] sm:$0xff]
      %v1091 = vld [vmem:[%s227 + $0x158] sm:$0xff]
      %v1092 = vld [vmem:[%s227 + $0x160] sm:$0xff]
      %v1093 = vld [vmem:[%s227 + $0x168] sm:$0xff]
      %v1094 = vld [vmem:[%s227 + $0x170] sm:$0xff]
      %v1095 = vld [vmem:[%s227 + $0x178] sm:$0xff]
      %v1096 = vld [vmem:[%s227 + $0x180] sm:$0xff]
      %v1097 = vld [vmem:[%s227 + $0x188] sm:$0xff]
      %v1098 = vld [vmem:[%s227 + $0x190] sm:$0xff]
      %v1099 = vld [vmem:[%s227 + $0x198] sm:$0xff]
      %v1100 = vld [vmem:[%s227 + $0x1a0] sm:$0xff]
      %v1101 = vld [vmem:[%s227 + $0x1a8] sm:$0xff]
      %v1102 = vld [vmem:[%s227 + $0x1b0] sm:$0xff]
      %v1103 = vld [vmem:[%s227 + $0x1b8] sm:$0xff]
      %v1104 = vld [vmem:[%s227 + $0x1c0] sm:$0xff]
      %v1105 = vld [vmem:[%s227 + $0x1c8] sm:$0xff]
      %v1106 = vld [vmem:[%s227 + $0x1d0] sm:$0xff]
      %v1107 = vld [vmem:[%s227 + $0x1d8] sm:$0xff]
      %v1108 = vld [vmem:[#allocation2] sm:$0xff]
      %v1109 = vld [vmem:[#allocation2 + $0x8] sm:$0xff]
      %v1110 = vld [vmem:[#allocation2 + $0x10] sm:$0xff]
      %v1111 = vld [vmem:[#allocation2 + $0x18] sm:$0xff]
      %v1112 = vld [vmem:[#allocation2 + $0x20] sm:$0xff]
      %v1113 = vld [vmem:[#allocation2 + $0x28] sm:$0xff]
      %v1114 = vld [vmem:[#allocation2 + $0x30] sm:$0xff]
      %v1115 = vld [vmem:[#allocation2 + $0x38] sm:$0xff]
      %v1116 = vld [vmem:[#allocation2 + $0x40] sm:$0xff]
      %v1117 = vld [vmem:[#allocation2 + $0x48] sm:$0xff]
      %v1118 = vld [vmem:[#allocation2 + $0x50] sm:$0xff]
      %v1119 = vld [vmem:[#allocation2 + $0x58] sm:$0xff]
      %v1120 = vld [vmem:[#allocation2 + $0x60] sm:$0xff]
      %v1121 = vld [vmem:[#allocation2 + $0x68] sm:$0xff]
      %v1122 = vld [vmem:[#allocation2 + $0x70] sm:$0xff]
      %v1123 = vld [vmem:[#allocation2 + $0x78] sm:$0xff]
      %v1124 = vld [vmem:[#allocation2 + $0x80] sm:$0xff]
      %v1125 = vld [vmem:[#allocation2 + $0x88] sm:$0xff]
      %v1126 = vld [vmem:[#allocation2 + $0x90] sm:$0xff]
      %v1127 = vld [vmem:[#allocation2 + $0x98] sm:$0xff]
      %v1128 = vld [vmem:[#allocation2 + $0xa0] sm:$0xff]
      %v1129 = vld [vmem:[#allocation2 + $0xa8] sm:$0xff]
      %v1130 = vld [vmem:[#allocation2 + $0xb0] sm:$0xff]
      %v1131 = vld [vmem:[#allocation2 + $0xb8] sm:$0xff]
      %v1132 = vld [vmem:[#allocation2 + $0xc0] sm:$0xff]
      %v1133 = vld [vmem:[#allocation2 + $0xc8] sm:$0xff]
      %v1134 = vld [vmem:[#allocation2 + $0xd0] sm:$0xff]
      %v1135 = vld [vmem:[#allocation2 + $0xd8] sm:$0xff]
      %v1136 = vld [vmem:[#allocation2 + $0xe0] sm:$0xff]
      %v1137 = vld [vmem:[#allocation2 + $0xe8] sm:$0xff]
      %v1138 = vld [vmem:[#allocation2 + $0xf0] sm:$0xff]
      %v1139 = vld [vmem:[#allocation2 + $0xf8] sm:$0xff]
      %v1140 = vld [vmem:[#allocation2 + $0x100] sm:$0xff]
      %v1141 = vld [vmem:[#allocation2 + $0x108] sm:$0xff]
      %v1142 = vld [vmem:[#allocation2 + $0x110] sm:$0xff]
      %v1143 = vld [vmem:[#allocation2 + $0x118] sm:$0xff]
      %v1144 = vld [vmem:[#allocation2 + $0x120] sm:$0xff]
      %v1145 = vld [vmem:[#allocation2 + $0x128] sm:$0xff]
      %v1146 = vld [vmem:[#allocation2 + $0x130] sm:$0xff]
      %v1147 = vld [vmem:[#allocation2 + $0x138] sm:$0xff]
      %vm1148 = vcmask 261120
      %v1150 = vsel %vm1148, %v1049, 0
      %v1153 = vsel %vm1148, %v1051, 0
      %v1156 = vsel %vm1148, %v1053, 0
      %v1159 = vsel %vm1148, %v1055, 0
      %v1162 = vsel %vm1148, %v1057, 0
      %v1165 = vsel %vm1148, %v1059, 0
      %v1168 = vsel %vm1148, %v1061, 0
      %v1171 = vsel %vm1148, %v1063, 0
      %v1174 = vsel %vm1148, %v1065, 0
      %v1177 = vsel %vm1148, %v1067, 0
      %v1180 = vsel %vm1148, %v1069, 0
      %v1183 = vsel %vm1148, %v1071, 0
      %v1186 = vsel %vm1148, %v1073, 0
      %v1189 = vsel %vm1148, %v1075, 0
      %v1192 = vsel %vm1148, %v1077, 0
      %v1195 = vsel %vm1148, %v1079, 0
      %v1198 = vsel %vm1148, %v1081, 0
      %v1201 = vsel %vm1148, %v1083, 0
      %v1204 = vsel %vm1148, %v1085, 0
      %v1207 = vsel %vm1148, %v1087, 0
      %v1210 = vsel %vm1148, %v1089, 0
      %v1213 = vsel %vm1148, %v1091, 0
      %v1216 = vsel %vm1148, %v1093, 0
      %v1219 = vsel %vm1148, %v1095, 0
      %v1222 = vsel %vm1148, %v1097, 0
      %v1225 = vsel %vm1148, %v1099, 0
      %v1228 = vsel %vm1148, %v1101, 0
      %v1231 = vsel %vm1148, %v1103, 0
      %v1234 = vsel %vm1148, %v1105, 0
      %v1237 = vsel %vm1148, %v1107, 0
      %1239 = vmatprep.subr.mxu0 %v1139
      %1240 = vmatpush1.msra.mxu0 %v1138
      %1241 = vmatprep.subr.mxu0 %v1137
      %1242 = vmatpush1.msra.mxu0 %v1136
      %1243 = vmatprep.subr.mxu0 %v1135
      %1244 = vmatpush1.msra.mxu0 %v1134
      %1245 = vmatprep.subr.mxu0 %v1133
      %1246 = vmatpush1.msra.mxu0 %v1132
      %1247 = vmatprep.subr.mxu0 %v1131
      %1248 = vmatpush1.msra.mxu0 %v1130
      %1249 = vmatprep.subr.mxu0 %v1129
      %1250 = vmatpush1.msra.mxu0 %v1128
      %1251 = vmatprep.subr.mxu0 %v1127
      %1252 = vmatpush1.msra.mxu0 %v1126
      %1253 = vmatprep.subr.mxu0 %v1125
      %1254 = vmatpush1.msra.mxu0 %v1124
      %1255 = vmatprep.subr.mxu0 %v1123
      %1256 = vmatpush1.msra.mxu0 %v1122
      %1257 = vmatprep.subr.mxu0 %v1121
      %1258 = vmatpush1.msra.mxu0 %v1120
      %1259 = vmatprep.subr.mxu0 %v1119
      %1260 = vmatpush1.msra.mxu0 %v1118
      %1261 = vmatprep.subr.mxu0 %v1117
      %1262 = vmatpush1.msra.mxu0 %v1116
      %1263 = vmatprep.subr.mxu0 %v1115
      %1264 = vmatpush1.msra.mxu0 %v1114
      %1265 = vmatprep.subr.mxu0 %v1113
      %1266 = vmatpush1.msra.mxu0 %v1112
      %1267 = vmatprep.subr.mxu0 %v1111
      %1268 = vmatpush1.msra.mxu0 %v1110
      %1269 = vmatprep.subr.mxu0 %v1109
      %1270 = vmatpush1.msra.mxu0 %v1108
      %1271 = vmatprep.subr.mxu0 0.0
      %1272 = vmatpush2.msra.mxu0 0.0
      %1273 = vmatprep.subr.mxu0 0.0
      %1274 = vmatpush2.msra.mxu0 0.0
      %1275 = vmatprep.subr.mxu0 0.0
      %1276 = vmatpush2.msra.mxu0 0.0
      %1277 = vmatprep.subr.mxu0 0.0
      %1278 = vmatpush2.msra.mxu0 0.0
      %1279 = vmatprep.subr.mxu0 0.0
      %1280 = vmatpush2.msra.mxu0 0.0
      %1281 = vmatprep.subr.mxu0 0.0
      %1282 = vmatpush2.msra.mxu0 0.0
      %1283 = vmatprep.subr.mxu0 0.0
      %1284 = vmatpush2.msra.mxu0 0.0
      %1285 = vmatprep.subr.mxu0 0.0
      %1286 = vmatpush2.msra.mxu0 0.0
      %1287 = vmatprep.subr.mxu0 0.0
      %1288 = vmatpush2.msra.mxu0 0.0
      %1289 = vmatprep.subr.mxu0 0.0
      %1290 = vmatpush2.msra.mxu0 0.0
      %1291 = vmatprep.subr.mxu0 0.0
      %1292 = vmatpush2.msra.mxu0 0.0
      %1293 = vmatprep.subr.mxu0 0.0
      %1294 = vmatpush2.msra.mxu0 0.0
      %1295 = vmatprep.subr.mxu0 %v1147
      %1296 = vmatpush2.msra.mxu0 %v1146
      %1297 = vmatprep.subr.mxu0 %v1145
      %1298 = vmatpush2.msra.mxu0 %v1144
      %1299 = vmatprep.subr.mxu0 %v1143
      %1300 = vmatpush2.msra.mxu0 %v1142
      %1301 = vmatprep.subr.mxu0 %v1141
      %1302 = vmatpush2.msra.mxu0 %v1140
      %1303 = vmatprep.mubr.f32.mxu0 %v1150
      %1304 = vmatmul.mubr.f32.gmra.mxu0 %v1048
      %v1305 = vpop.f32.mrf.mxu0
      %v1306 = vadd.f32 0.0, %v1305
      %v1307 = vpop.f32.mrf.mxu0
      %v1308 = vadd.f32 0.0, %v1307
      %1309 = vmatprep.mubr.f32.mxu0 %v1153
      %1310 = vmatmul.mubr.f32.gmra.mxu0 %v1050
      %v1311 = vpop.f32.mrf.mxu0
      %v1312 = vadd.f32 0.0, %v1311
      %v1313 = vpop.f32.mrf.mxu0
      %v1314 = vadd.f32 0.0, %v1313
      %1315 = vmatprep.mubr.f32.mxu0 %v1156
      %1316 = vmatmul.mubr.f32.gmra.mxu0 %v1052
      %v1317 = vpop.f32.mrf.mxu0
      %v1318 = vadd.f32 0.0, %v1317
      %v1319 = vpop.f32.mrf.mxu0
      %v1320 = vadd.f32 0.0, %v1319
      %1321 = vmatprep.mubr.f32.mxu0 %v1159
      %1322 = vmatmul.mubr.f32.gmra.mxu0 %v1054
      %v1323 = vpop.f32.mrf.mxu0
      %v1324 = vadd.f32 0.0, %v1323
      %v1325 = vpop.f32.mrf.mxu0
      %v1326 = vadd.f32 0.0, %v1325
      %1327 = vmatprep.mubr.f32.mxu0 %v1162
      %1328 = vmatmul.mubr.f32.gmra.mxu0 %v1056
      %v1329 = vpop.f32.mrf.mxu0
      %v1330 = vadd.f32 0.0, %v1329
      %v1331 = vpop.f32.mrf.mxu0
      %v1332 = vadd.f32 0.0, %v1331
      %1333 = vmatprep.mubr.f32.mxu0 %v1165
      %1334 = vmatmul.mubr.f32.gmra.mxu0 %v1058
      %v1335 = vpop.f32.mrf.mxu0
      %v1336 = vadd.f32 0.0, %v1335
      %v1337 = vpop.f32.mrf.mxu0
      %v1338 = vadd.f32 0.0, %v1337
      %1339 = vmatprep.mubr.f32.mxu0 %v1168
      %1340 = vmatmul.mubr.f32.gmra.mxu0 %v1060
      %v1341 = vpop.f32.mrf.mxu0
      %v1342 = vadd.f32 0.0, %v1341
      %v1343 = vpop.f32.mrf.mxu0
      %v1344 = vadd.f32 0.0, %v1343
      %1345 = vmatprep.mubr.f32.mxu0 %v1171
      %1346 = vmatmul.mubr.f32.gmra.mxu0 %v1062
      %v1347 = vpop.f32.mrf.mxu0
      %v1348 = vadd.f32 0.0, %v1347
      %v1349 = vpop.f32.mrf.mxu0
      %v1350 = vadd.f32 0.0, %v1349
      %1351 = vmatprep.mubr.f32.mxu0 %v1174
      %1352 = vmatmul.mubr.f32.gmra.mxu0 %v1064
      %v1353 = vpop.f32.mrf.mxu0
      %v1354 = vadd.f32 0.0, %v1353
      %v1355 = vpop.f32.mrf.mxu0
      %v1356 = vadd.f32 0.0, %v1355
      %1357 = vmatprep.mubr.f32.mxu0 %v1177
      %1358 = vmatmul.mubr.f32.gmra.mxu0 %v1066
      %v1359 = vpop.f32.mrf.mxu0
      %v1360 = vadd.f32 0.0, %v1359
      %v1361 = vpop.f32.mrf.mxu0
      %v1362 = vadd.f32 0.0, %v1361
      %1363 = vmatprep.mubr.f32.mxu0 %v1180
      %1364 = vmatmul.mubr.f32.gmra.mxu0 %v1068
      %v1365 = vpop.f32.mrf.mxu0
      %v1366 = vadd.f32 0.0, %v1365
      %v1367 = vpop.f32.mrf.mxu0
      %v1368 = vadd.f32 0.0, %v1367
      %1369 = vmatprep.mubr.f32.mxu0 %v1183
      %1370 = vmatmul.mubr.f32.gmra.mxu0 %v1070
      %v1371 = vpop.f32.mrf.mxu0
      %v1372 = vadd.f32 0.0, %v1371
      %v1373 = vpop.f32.mrf.mxu0
      %v1374 = vadd.f32 0.0, %v1373
      %1375 = vmatprep.mubr.f32.mxu0 %v1186
      %1376 = vmatmul.mubr.f32.gmra.mxu0 %v1072
      %v1377 = vpop.f32.mrf.mxu0
      %v1378 = vadd.f32 0.0, %v1377
      %v1379 = vpop.f32.mrf.mxu0
      %v1380 = vadd.f32 0.0, %v1379
      %1381 = vmatprep.mubr.f32.mxu0 %v1189
      %1382 = vmatmul.mubr.f32.gmra.mxu0 %v1074
      %v1383 = vpop.f32.mrf.mxu0
      %v1384 = vadd.f32 0.0, %v1383
      %v1385 = vpop.f32.mrf.mxu0
      %v1386 = vadd.f32 0.0, %v1385
      %1387 = vmatprep.mubr.f32.mxu0 %v1192
      %1388 = vmatmul.mubr.f32.gmra.mxu0 %v1076
      %v1389 = vpop.f32.mrf.mxu0
      %v1390 = vadd.f32 0.0, %v1389
      %v1391 = vpop.f32.mrf.mxu0
      %v1392 = vadd.f32 0.0, %v1391
      %1393 = vmatprep.mubr.f32.mxu0 %v1195
      %1394 = vmatmul.mubr.f32.gmra.mxu0 %v1078
      %v1395 = vpop.f32.mrf.mxu0
      %v1396 = vadd.f32 0.0, %v1395
      %v1397 = vpop.f32.mrf.mxu0
      %v1398 = vadd.f32 0.0, %v1397
      %1399 = vmatprep.mubr.f32.mxu0 %v1198
      %1400 = vmatmul.mubr.f32.gmra.mxu0 %v1080
      %v1401 = vpop.f32.mrf.mxu0
      %v1402 = vadd.f32 0.0, %v1401
      %v1403 = vpop.f32.mrf.mxu0
      %v1404 = vadd.f32 0.0, %v1403
      %1405 = vmatprep.mubr.f32.mxu0 %v1201
      %1406 = vmatmul.mubr.f32.gmra.mxu0 %v1082
      %v1407 = vpop.f32.mrf.mxu0
      %v1408 = vadd.f32 0.0, %v1407
      %v1409 = vpop.f32.mrf.mxu0
      %v1410 = vadd.f32 0.0, %v1409
      %1411 = vmatprep.mubr.f32.mxu0 %v1204
      %1412 = vmatmul.mubr.f32.gmra.mxu0 %v1084
      %v1413 = vpop.f32.mrf.mxu0
      %v1414 = vadd.f32 0.0, %v1413
      %v1415 = vpop.f32.mrf.mxu0
      %v1416 = vadd.f32 0.0, %v1415
      %1417 = vmatprep.mubr.f32.mxu0 %v1207
      %1418 = vmatmul.mubr.f32.gmra.mxu0 %v1086
      %v1419 = vpop.f32.mrf.mxu0
      %v1420 = vadd.f32 0.0, %v1419
      %v1421 = vpop.f32.mrf.mxu0
      %v1422 = vadd.f32 0.0, %v1421
      %1423 = vmatprep.mubr.f32.mxu0 %v1210
      %1424 = vmatmul.mubr.f32.gmra.mxu0 %v1088
      %v1425 = vpop.f32.mrf.mxu0
      %v1426 = vadd.f32 0.0, %v1425
      %v1427 = vpop.f32.mrf.mxu0
      %v1428 = vadd.f32 0.0, %v1427
      %1429 = vmatprep.mubr.f32.mxu0 %v1213
      %1430 = vmatmul.mubr.f32.gmra.mxu0 %v1090
      %v1431 = vpop.f32.mrf.mxu0
      %v1432 = vadd.f32 0.0, %v1431
      %v1433 = vpop.f32.mrf.mxu0
      %v1434 = vadd.f32 0.0, %v1433
      %1435 = vmatprep.mubr.f32.mxu0 %v1216
      %1436 = vmatmul.mubr.f32.gmra.mxu0 %v1092
      %v1437 = vpop.f32.mrf.mxu0
      %v1438 = vadd.f32 0.0, %v1437
      %v1439 = vpop.f32.mrf.mxu0
      %v1440 = vadd.f32 0.0, %v1439
      %1441 = vmatprep.mubr.f32.mxu0 %v1219
      %1442 = vmatmul.mubr.f32.gmra.mxu0 %v1094
      %v1443 = vpop.f32.mrf.mxu0
      %v1444 = vadd.f32 0.0, %v1443
      %v1445 = vpop.f32.mrf.mxu0
      %v1446 = vadd.f32 0.0, %v1445
      %1447 = vmatprep.mubr.f32.mxu0 %v1222
      %1448 = vmatmul.mubr.f32.gmra.mxu0 %v1096
      %v1449 = vpop.f32.mrf.mxu0
      %v1450 = vadd.f32 0.0, %v1449
      %v1451 = vpop.f32.mrf.mxu0
      %v1452 = vadd.f32 0.0, %v1451
      %1453 = vmatprep.mubr.f32.mxu0 %v1225
      %1454 = vmatmul.mubr.f32.gmra.mxu0 %v1098
      %v1455 = vpop.f32.mrf.mxu0
      %v1456 = vadd.f32 0.0, %v1455
      %v1457 = vpop.f32.mrf.mxu0
      %v1458 = vadd.f32 0.0, %v1457
      %1459 = vmatprep.mubr.f32.mxu0 %v1228
      %1460 = vmatmul.mubr.f32.gmra.mxu0 %v1100
      %v1461 = vpop.f32.mrf.mxu0
      %v1462 = vadd.f32 0.0, %v1461
      %v1463 = vpop.f32.mrf.mxu0
      %v1464 = vadd.f32 0.0, %v1463
      %1465 = vmatprep.mubr.f32.mxu0 %v1231
      %1466 = vmatmul.mubr.f32.gmra.mxu0 %v1102
      %v1467 = vpop.f32.mrf.mxu0
      %v1468 = vadd.f32 0.0, %v1467
      %v1469 = vpop.f32.mrf.mxu0
      %v1470 = vadd.f32 0.0, %v1469
      %1471 = vmatprep.mubr.f32.mxu0 %v1234
      %1472 = vmatmul.mubr.f32.gmra.mxu0 %v1104
      %v1473 = vpop.f32.mrf.mxu0
      %v1474 = vadd.f32 0.0, %v1473
      %v1475 = vpop.f32.mrf.mxu0
      %v1476 = vadd.f32 0.0, %v1475
      %1477 = vmatprep.mubr.f32.mxu0 %v1237
      %1478 = vmatmul.mubr.f32.gmra.mxu0 %v1106
      %v1479 = vpop.f32.mrf.mxu0
      %v1480 = vadd.f32 0.0, %v1479
      %v1481 = vpop.f32.mrf.mxu0
      %v1482 = vadd.f32 0.0, %v1481
      %1483 = vdwg.mxu0
      %1484 = vst [vmem:[%s238] sm:$0xff] %v1306
      %vm1485 = vcmask 556032
      %1486 = vst.msk [vmem:[%s238 + $0x8] sm:$0xff] %vm1485, %v1308
      %1487 = vst [vmem:[%s238 + $0x10] sm:$0xff] %v1312
      %1488 = vst.msk [vmem:[%s238 + $0x18] sm:$0xff] %vm1485, %v1314
      %1489 = vst [vmem:[%s238 + $0x20] sm:$0xff] %v1318
      %1490 = vst.msk [vmem:[%s238 + $0x28] sm:$0xff] %vm1485, %v1320
      %1491 = vst [vmem:[%s238 + $0x30] sm:$0xff] %v1324
      %1492 = vst.msk [vmem:[%s238 + $0x38] sm:$0xff] %vm1485, %v1326
      %1493 = vst [vmem:[%s238 + $0x40] sm:$0xff] %v1330
      %1494 = vst.msk [vmem:[%s238 + $0x48] sm:$0xff] %vm1485, %v1332
      %1495 = vst [vmem:[%s238 + $0x50] sm:$0xff] %v1336
      %1496 = vst.msk [vmem:[%s238 + $0x58] sm:$0xff] %vm1485, %v1338
      %1497 = vst [vmem:[%s238 + $0x60] sm:$0xff] %v1342
      %1498 = vst.msk [vmem:[%s238 + $0x68] sm:$0xff] %vm1485, %v1344
      %1499 = vst [vmem:[%s238 + $0x70] sm:$0xff] %v1348
      %1500 = vst.msk [vmem:[%s238 + $0x78] sm:$0xff] %vm1485, %v1350
      %1501 = vst [vmem:[%s238 + $0x80] sm:$0xff] %v1354
      %1502 = vst.msk [vmem:[%s238 + $0x88] sm:$0xff] %vm1485, %v1356
      %1503 = vst [vmem:[%s238 + $0x90] sm:$0xff] %v1360
      %1504 = vst.msk [vmem:[%s238 + $0x98] sm:$0xff] %vm1485, %v1362
      %1505 = vst [vmem:[%s238 + $0xa0] sm:$0xff] %v1366
      %1506 = vst.msk [vmem:[%s238 + $0xa8] sm:$0xff] %vm1485, %v1368
      %1507 = vst [vmem:[%s238 + $0xb0] sm:$0xff] %v1372
      %1508 = vst.msk [vmem:[%s238 + $0xb8] sm:$0xff] %vm1485, %v1374
      %1509 = vst [vmem:[%s238 + $0xc0] sm:$0xff] %v1378
      %1510 = vst.msk [vmem:[%s238 + $0xc8] sm:$0xff] %vm1485, %v1380
      %1511 = vst [vmem:[%s238 + $0xd0] sm:$0xff] %v1384
      %1512 = vst.msk [vmem:[%s238 + $0xd8] sm:$0xff] %vm1485, %v1386
      %1513 = vst [vmem:[%s238 + $0xe0] sm:$0xff] %v1390
      %1514 = vst.msk [vmem:[%s238 + $0xe8] sm:$0xff] %vm1485, %v1392
      %1515 = vst [vmem:[%s238 + $0xf0] sm:$0xff] %v1396
      %1516 = vst.msk [vmem:[%s238 + $0xf8] sm:$0xff] %vm1485, %v1398
      %1517 = vst [vmem:[%s238 + $0x100] sm:$0xff] %v1402
      %1518 = vst.msk [vmem:[%s238 + $0x108] sm:$0xff] %vm1485, %v1404
      %1519 = vst [vmem:[%s238 + $0x110] sm:$0xff] %v1408
      %1520 = vst.msk [vmem:[%s238 + $0x118] sm:$0xff] %vm1485, %v1410
      %1521 = vst [vmem:[%s238 + $0x120] sm:$0xff] %v1414
      %1522 = vst.msk [vmem:[%s238 + $0x128] sm:$0xff] %vm1485, %v1416
      %1523 = vst [vmem:[%s238 + $0x130] sm:$0xff] %v1420
      %1524 = vst.msk [vmem:[%s238 + $0x138] sm:$0xff] %vm1485, %v1422
      %1525 = vst [vmem:[%s238 + $0x140] sm:$0xff] %v1426
      %1526 = vst.msk [vmem:[%s238 + $0x148] sm:$0xff] %vm1485, %v1428
      %1527 = vst [vmem:[%s238 + $0x150] sm:$0xff] %v1432
      %1528 = vst.msk [vmem:[%s238 + $0x158] sm:$0xff] %vm1485, %v1434
      %1529 = vst [vmem:[%s238 + $0x160] sm:$0xff] %v1438
      %1530 = vst.msk [vmem:[%s238 + $0x168] sm:$0xff] %vm1485, %v1440
      %1531 = vst [vmem:[%s238 + $0x170] sm:$0xff] %v1444
      %1532 = vst.msk [vmem:[%s238 + $0x178] sm:$0xff] %vm1485, %v1446
      %1533 = vst [vmem:[%s238 + $0x180] sm:$0xff] %v1450
      %1534 = vst.msk [vmem:[%s238 + $0x188] sm:$0xff] %vm1485, %v1452
      %1535 = vst [vmem:[%s238 + $0x190] sm:$0xff] %v1456
      %1536 = vst.msk [vmem:[%s238 + $0x198] sm:$0xff] %vm1485, %v1458
      %1537 = vst [vmem:[%s238 + $0x1a0] sm:$0xff] %v1462
      %1538 = vst.msk [vmem:[%s238 + $0x1a8] sm:$0xff] %vm1485, %v1464
      %1539 = vst [vmem:[%s238 + $0x1b0] sm:$0xff] %v1468
      %1540 = vst.msk [vmem:[%s238 + $0x1b8] sm:$0xff] %vm1485, %v1470
      %1541 = vst [vmem:[%s238 + $0x1c0] sm:$0xff] %v1474
      %1542 = vst.msk [vmem:[%s238 + $0x1c8] sm:$0xff] %vm1485, %v1476
      %1543 = vst [vmem:[%s238 + $0x1d0] sm:$0xff] %v1480
      %1544 = vst.msk [vmem:[%s238 + $0x1d8] sm:$0xff] %vm1485, %v1482
      %s1545 = smul.u32 %s19, 4
      %s1546 = sadd.s32 %s1545, %s20
      %s1547 = smul.u32 30, %s1546
      %p1548 = scmp.lt.s32.totalorder %s1547, 119
      %s1549 = scalar_select %p1548, %s1547, 119
      %s1550 = smul.addr %s1549, 2
      %s1551 = smul.addr %s1550, 8
      %s1552 = scalar_lea.vmem %s4, %s1551
      // Predicated region
      $region41: #{tpu_custom_call.1} parent=35 // pred_check
        %p1553 = pneg %p142
      $region42: #{tpu_custom_call.1} parent=35 // pred_check_branch
        %1555 = sbr.rel (%p1553) target = $region44
      $region43: #{tpu_custom_call.1} parent=35 // pred_region
        %s1556 = smul.u32 %s19, 4
        %s1557 = sadd.s32 %s1556, %s20
        %s1558 = smul.u32 30, %s1557
      $region44: #{tpu_custom_call.1} parent=35 // pred_fallthru
        _
    $region36: #{tpu_custom_call.1} parent=5 // pred_fallthru
      _
    %p1559 = scmp.le.s32.totalorder 2, %s10
    // Predicated region
    $region45: #{tpu_custom_call.1} parent=5 // pred_check
      %p1560 = pneg %p1559
    $region46: #{tpu_custom_call.1} parent=5 // pred_check_branch
      %1562 = sbr.rel (%p1560) target = $region48
    $region47: #{tpu_custom_call.1} parent=5 // pred_region
      %s1563 = ssub.s32 %s10, 2
      // Predicated region
      $region49: #{tpu_custom_call.1} parent=47 // pred_check
        %p1564 = pneg %p148
      $region50: #{tpu_custom_call.1} parent=47 // pred_check_branch
        %1566 = sbr.rel (%p1564) target = $region52
      $region51: #{tpu_custom_call.1} parent=47 // pred_region
        %s1567 = smul.u32 %s21, 4
        %s1568 = sadd.s32 %s1567, %s22
        %s1569 = smul.u32 30, %s1568
        %p1570 = scmp.lt.s32.totalorder %s1569, 119
        %s1571 = scalar_select %p1570, %s1569, 119
        %s1572 = smul.addr %s1571, 2
        %s1573 = smul.addr %s1572, 8
        %s1574 = scalar_lea.vmem %s4, %s1573
      $region52: #{tpu_custom_call.1} parent=47 // pred_fallthru
        _
    $region48: #{tpu_custom_call.1} parent=5 // pred_fallthru
      _
  $region6: #{tpu_custom_call.1} parent=0 // loop_footer
    %s14 = sadd.s32 1, %s10
  $region7: #{tpu_custom_call.1} parent=0 // loop_footer_branch
    %9 = sbr.rel target = $region3
  $region8: #{tpu_custom_call.1} parent=0 // loop_exit
    _

</llo_original>
